<compile_context>
chip_gen: v6e
topology: v6e:2x2x1
jax: 0.10.0
libtpu: 0.0.40
codegen_flags: <defaults>
</compile_context>

<pallas_src>
import jax
import jax.numpy as jnp
from jax import lax
from jax.experimental import pallas as pl
from jax.experimental.pallas import tpu as pltpu


# ------------------------- small math helpers (in-kernel) -------------------

def _silu(x):
    return x * (1.0 / (1.0 + jnp.exp(-x)))


def _softplus(x):
    # matches torch.nn.functional.softplus default (beta=1, threshold=20)
    return jnp.where(x > 20.0, x, jnp.log1p(jnp.exp(jnp.minimum(x, 20.0))))


# ------------------------------- Pallas kernel ------------------------------

def residual_mamba_kernel(x_ref, rms_w_ref,
                          w_in_ref, b_in_ref,
                          conv_w_ref, conv_b_ref,
                          w_x_ref, w_dt_ref, b_dt_ref,
                          a_log_ref,
                          w_out_ref, b_out_ref,
                          out_ref,
                          dA_s, dBu_s, h_s):
    Bb, L, d_model = x_ref.shape
    dt_rank, d_inner = w_dt_ref.shape
    n_state = a_log_ref.shape[0]          # a_log is stored (n_state, d_inner)
    K = conv_w_ref.shape[0]
    M = Bb * L
    bf16 = jnp.bfloat16

    x3 = x_ref[...].astype(jnp.float32)                    # (Bb, L, d_model)
    x2 = x3.reshape(M, d_model)                            # (Bb*L, d_model)

    # ---- RMSNorm (pre-norm of the residual block) ----
    ms = jnp.mean(x2 * x2, axis=-1, keepdims=True)
    xn = x2 * lax.rsqrt(ms + 1e-5) * rms_w_ref[...]        # (M, d_model)

    # ---- in_proj : (M, d_model) @ (d_model, 2*d_inner) + bias ----
    xr = jnp.dot(xn.astype(bf16), w_in_ref[...],
                 preferred_element_type=jnp.float32) + b_in_ref[...]
    xc = xr[:, :d_inner]                                   # (M, d_inner)
    res = xr[:, d_inner:]                                  # (M, d_inner)

    # ---- causal depthwise conv1d along the sequence (padding K-1, crop L) ----
    # out[t] = bias + sum_k w[k] * xc[t + k - (K-1)]
    # NOTE: at long L the shifted copies could instead use pltpu.roll (XLU) +
    # an iota mask; at these sizes the concat temporaries are negligible.
    xc3 = xc.reshape(Bb, L, d_inner)
    cw = conv_w_ref[...]                                   # (K, d_inner) f32
    conv = (jnp.zeros((Bb, L, d_inner), jnp.float32)
            + conv_b_ref[...].reshape(1, 1, d_inner))
    for k in range(K):
        shift = K - 1 - k
        if shift == 0:
            xs = xc3
        else:
            xs = jnp.concatenate(
                [jnp.zeros((Bb, shift, d_inner), jnp.float32),
                 xc3[:, :L - shift, :]], axis=1)
        conv = conv + cw[k:k + 1, :].reshape(1, 1, d_inner) * xs
    u = _silu(conv).reshape(M, d_inner)                    # (M, d_inner)

    # ---- x_proj : (M, d_inner) @ (d_inner, dt_rank + 2*n_state) ----
    xp = jnp.dot(u.astype(bf16), w_x_ref[...],
                 preferred_element_type=jnp.float32)
    dlt_raw = xp[:, :dt_rank]                              # (M, dt_rank)
    B_ssm = xp[:, dt_rank:dt_rank + n_state]               # (M, n_state)
    C_ssm = xp[:, dt_rank + n_state:dt_rank + 2 * n_state]  # (M, n_state)

    # ---- dt_proj + softplus ----
    delta = _softplus(
        jnp.dot(dlt_raw.astype(bf16), w_dt_ref[...],
                preferred_element_type=jnp.float32) + b_dt_ref[...])  # (M, d_inner)

    # ---- discretize in (n_state, d_inner) = (sublane, lane) layout ----
    A = -jnp.exp(a_log_ref[...])                           # (n_state, d_inner)
    dA_s[...] = jnp.exp(delta[:, None, :] * A[None, :, :])  # (M, n, d)
    dBu_s[...] = (delta * u)[:, None, :] * B_ssm[:, :, None]  # (M, n, d)

    # ---- sequential selective scan: only the recurrence stays serial ----
    def step(t, carry):
        new = []
        for b in range(Bb):                    # static unroll over batch block
            r = b * L + t
            hb = dA_s[r] * carry[b] + dBu_s[r]  # (n_state, d_inner)
            h_s[r] = hb
            new.append(hb)
        return tuple(new)

    h0 = tuple(jnp.zeros((n_state, d_inner), jnp.float32) for _ in range(Bb))
    unroll = L if L <= 16 else 8
    lax.fori_loop(0, L, step, h0, unroll=unroll)

    # ---- hoisted C-contraction, gate, out_proj, residual add ----
    # y[m, d] = sum_n h[m, n, d] * C[m, n]   (vectorized over all timesteps)
    y = jnp.sum(h_s[...] * C_ssm[:, :, None], axis=1)       # (M, d_inner)
    y = y * _silu(res)

    out = (jnp.dot(y.astype(bf16), w_out_ref[...],
                   preferred_element_type=jnp.float32)
           + b_out_ref[...] + x2)                            # + residual x
    out_ref[...] = out.reshape(Bb, L, d_model).astype(out_ref.dtype)


# --------------------------------- wrapper ----------------------------------

def residual_block_pallas(x, params, *, block_b=None):
    B, L, d_model = x.shape
    d_inner = params["w_dt"].shape[1]
    n_state = params["a_log"].shape[1]

    if block_b is None:
        block_b = B if B <= 8 else 1
    assert B % block_b == 0
    Bb = block_b

    bf16 = jnp.bfloat16
    rms_w = params["rms_w"].astype(jnp.float32)
    w_in = params["w_in"].astype(bf16)
    b_in = params["b_in"].astype(jnp.float32)
    conv_w = params["conv_w"].astype(jnp.float32)
    conv_b = params["conv_b"].astype(jnp.float32)
    w_x = params["w_x"].astype(bf16)
    w_dt = params["w_dt"].astype(bf16)
    b_dt = params["b_dt"].astype(jnp.float32)
    a_log_t = jnp.transpose(params["a_log"]).astype(jnp.float32)  # (n_state, d_inner)
    w_out = params["w_out"].astype(bf16)
    b_out = params["b_out"].astype(jnp.float32)

    def full(arr):
        return pl.BlockSpec(arr.shape, lambda b: (0,) * arr.ndim)

    grid_spec = pltpu.PrefetchScalarGridSpec(
        num_scalar_prefetch=0,
        grid=(B // Bb,),
        in_specs=[
            pl.BlockSpec((Bb, L, d_model), lambda b: (b, 0, 0)),   # x
            full(rms_w),
            full(w_in), full(b_in),
            full(conv_w), full(conv_b),
            full(w_x), full(w_dt), full(b_dt),
            full(a_log_t),
            full(w_out), full(b_out),
        ],
        out_specs=pl.BlockSpec((Bb, L, d_model), lambda b: (b, 0, 0)),
        scratch_shapes=[
            pltpu.VMEM((Bb * L, n_state, d_inner), jnp.float32),   # deltaA
            pltpu.VMEM((Bb * L, n_state, d_inner), jnp.float32),   # deltaB * u
            pltpu.VMEM((Bb * L, n_state, d_inner), jnp.float32),   # h states
        ],
    )

    return pl.pallas_call(
        residual_mamba_kernel,
        out_shape=jax.ShapeDtypeStruct((B, L, d_model), jnp.float32),
        grid_spec=grid_spec,
        compiler_params=pltpu.CompilerParams(
            dimension_semantics=("parallel",)),
    )(x, rms_w, w_in, b_in, conv_w, conv_b, w_x, w_dt, b_dt, a_log_t,
      w_out, b_out)


# --------------------------- pure-JAX reference ------------------------------
# Mirrors the kernel's mixed-precision policy (bf16 MXU inputs, f32 accumulate,
# f32 elementwise), matching the PyTorch forward-pass structure.

def residual_block_ref(x, params, eps=1e-5):
    B, L, d_model = x.shape
    d_inner = params["w_dt"].shape[1]
    dt_rank = params["w_dt"].shape[0]
    n_state = params["a_log"].shape[1]
    K = params["conv_w"].shape[0]
    bf16 = jnp.bfloat16

    def mm(a, w):
        return jnp.dot(a.astype(bf16), w.astype(bf16),
                       preferred_element_type=jnp.float32)

    # RMSNorm
    xn = x * lax.rsqrt(jnp.mean(x * x, axis=-1, keepdims=True) + eps) \
        * params["rms_w"][0]

    xr = (mm(xn.reshape(B * L, d_model), params["w_in"])
          .reshape(B, L, 2 * d_inner) + params["b_in"][0])
    xc, res = xr[..., :d_inner], xr[..., d_inner:]

    pad = jnp.pad(xc, ((0, 0), (K - 1, 0), (0, 0)))
    conv = jnp.broadcast_to(params["conv_b"][0][None, None, :], xc.shape)
    for k in range(K):
        conv = conv + params["conv_w"][k][None, None, :] * pad[:, k:k + L, :]
    u = _silu(conv)

    xp = mm(u.reshape(B * L, d_inner), params["w_x"]).reshape(B, L, -1)
    dlt_raw = xp[..., :dt_rank]
    B_ssm = xp[..., dt_rank:dt_rank + n_state]
    C_ssm = xp[..., dt_rank + n_state:]
    delta = _softplus(
        mm(dlt_raw.reshape(B * L, dt_rank), params["w_dt"])
        .reshape(B, L, d_inner) + params["b_dt"][0])

    A = -jnp.exp(params["a_log"])                          # (d_inner, n_state)
    dA = jnp.exp(jnp.einsum("bld,dn->bldn", delta, A))
    dBu = jnp.einsum("bld,bln,bld->bldn", delta, B_ssm, u)

    def step(h, inp):
        dA_t, dBu_t, C_t = inp
        h = dA_t * h + dBu_t
        y_t = jnp.einsum("bdn,bn->bd", h, C_t)
        return h, y_t

    h0 = jnp.zeros((B, d_inner, n_state), jnp.float32)
    _, ys = lax.scan(step, h0,
                     (dA.transpose(1, 0, 2, 3),
                      dBu.transpose(1, 0, 2, 3),
                      C_ssm.transpose(1, 0, 2)))
    y = ys.transpose(1, 0, 2) * _silu(res)
    out = (mm(y.reshape(B * L, d_inner), params["w_out"])
           .reshape(B, L, d_model) + params["b_out"][0])
    return out + x                                         # residual add


# ----------------------------------- main ------------------------------------

if __name__ == "__main__":
    # module hyper-params (small, consistent with the PyTorch module)
    d_model, d_inner, n_state, dt_rank, K = 32, 64, 16, 8, 3
    Bsz, L = 2, 8

    key = jax.random.PRNGKey(0)
    ks = jax.random.split(key, 13)

    def dense(k, fan_in, fan_out):
        return (jax.random.normal(k, (fan_in, fan_out), jnp.float32)
                / jnp.sqrt(jnp.float32(fan_in)))

    params = {
        # RMSNorm weight (module init is ones; perturb to make the test real)
        "rms_w": 1.0 + 0.1 * jax.random.normal(ks[11], (1, d_model), jnp.float32),
        # in_proj: Linear(d_model -> 2*d_inner), bias=True
        "w_in": dense(ks[0], d_model, 2 * d_inner),
        "b_in": 0.01 * jax.random.normal(ks[1], (1, 2 * d_inner), jnp.float32),
        # depthwise conv1d: weight (K, d_inner), bias (1, d_inner)
        "conv_w": jax.random.normal(ks[2], (K, d_inner), jnp.float32) / jnp.sqrt(3.0),
        "conv_b": 0.01 * jax.random.normal(ks[3], (1, d_inner), jnp.float32),
        # x_proj: Linear(d_inner -> dt_rank + 2*n_state), bias=False
        "w_x": dense(ks[4], d_inner, dt_rank + 2 * n_state),
        # dt_proj: Linear(dt_rank -> d_inner), bias=True
        "w_dt": dense(ks[5], dt_rank, d_inner),
        "b_dt": 0.01 * jax.random.normal(ks[6], (1, d_inner), jnp.float32),
        # SSM params (PyTorch layout; wrapper transposes to (n_state, d_inner))
        "a_log": jax.random.normal(ks[7], (d_inner, n_state), jnp.float32),
        # self.D exists in the module but is never used in forward() -> omitted.
        # out_proj: Linear(d_inner -> d_model), bias=True
        "w_out": dense(ks[8], d_inner, d_model),
        "b_out": 0.01 * jax.random.normal(ks[9], (1, d_model), jnp.float32),
    }

    x = jax.random.normal(ks[10], (Bsz, L, d_model), jnp.float32)

    out = jax.block_until_ready(residual_block_pallas(x, params))
    ref = jax.block_until_ready(residual_block_ref(x, params))

    assert out.shape == (Bsz, L, d_model)
    assert jnp.allclose(out, ref, rtol=2e-3, atol=2e-3), (
        float(jnp.max(jnp.abs(out - ref))))

    print("KERNEL_OK")
</pallas_src>

<mosaic_0001>
module attributes {stable_mosaic.version = 11 : i64} {
  func.func @residual_mamba_kernel(%arg0: i32, %arg1: memref<2x8x32xf32, #tpu.memory_space<vmem>>, %arg2: memref<1x32xf32, #tpu.memory_space<vmem>>, %arg3: memref<32x128xbf16, #tpu.memory_space<vmem>>, %arg4: memref<1x128xf32, #tpu.memory_space<vmem>>, %arg5: memref<3x64xf32, #tpu.memory_space<vmem>>, %arg6: memref<1x64xf32, #tpu.memory_space<vmem>>, %arg7: memref<64x40xbf16, #tpu.memory_space<vmem>>, %arg8: memref<8x64xbf16, #tpu.memory_space<vmem>>, %arg9: memref<1x64xf32, #tpu.memory_space<vmem>>, %arg10: memref<16x64xf32, #tpu.memory_space<vmem>>, %arg11: memref<64x32xbf16, #tpu.memory_space<vmem>>, %arg12: memref<1x32xf32, #tpu.memory_space<vmem>>, %arg13: memref<2x8x32xf32, #tpu.memory_space<vmem>>, %arg14: memref<16x16x64xf32, #tpu.memory_space<vmem>>, %arg15: memref<16x16x64xf32, #tpu.memory_space<vmem>>, %arg16: memref<16x16x64xf32, #tpu.memory_space<vmem>>) attributes {dimension_semantics = [#tpu.dimension_semantics<parallel>], iteration_bounds = array<i64: 1>, scalar_prefetch = 0 : i64, scratch_operands = 3 : i64, tpu.core_type = #tpu.core_type<tc>, window_params = [{transform_indices = @transform_0, window_bounds = array<i64: 2, 8, 32>}, {pipeline_mode = #tpu.pipeline_mode<synchronous>, transform_indices = @transform_1, window_bounds = array<i64: 1, 32>}, {pipeline_mode = #tpu.pipeline_mode<synchronous>, transform_indices = @transform_2, window_bounds = array<i64: 32, 128>}, {pipeline_mode = #tpu.pipeline_mode<synchronous>, transform_indices = @transform_3, window_bounds = array<i64: 1, 128>}, {pipeline_mode = #tpu.pipeline_mode<synchronous>, transform_indices = @transform_4, window_bounds = array<i64: 3, 64>}, {pipeline_mode = #tpu.pipeline_mode<synchronous>, transform_indices = @transform_5, window_bounds = array<i64: 1, 64>}, {pipeline_mode = #tpu.pipeline_mode<synchronous>, transform_indices = @transform_6, window_bounds = array<i64: 64, 40>}, {pipeline_mode = #tpu.pipeline_mode<synchronous>, transform_indices = @transform_7, window_bounds = array<i64: 8, 64>}, {pipeline_mode = #tpu.pipeline_mode<synchronous>, transform_indices = @transform_8, window_bounds = array<i64: 1, 64>}, {pipeline_mode = #tpu.pipeline_mode<synchronous>, transform_indices = @transform_9, window_bounds = array<i64: 16, 64>}, {pipeline_mode = #tpu.pipeline_mode<synchronous>, transform_indices = @transform_10, window_bounds = array<i64: 64, 32>}, {pipeline_mode = #tpu.pipeline_mode<synchronous>, transform_indices = @transform_11, window_bounds = array<i64: 1, 32>}, {transform_indices = @transform_12, window_bounds = array<i64: 2, 8, 32>}]} {
    %c0 = arith.constant 0 : index
    %c0_0 = arith.constant 0 : index
    %c0_1 = arith.constant 0 : index
    %0 = vector.load %arg1[%c0, %c0_0, %c0_1] : memref<2x8x32xf32, #tpu.memory_space<vmem>>, vector<2x8x32xf32>
    %1 = vector.shape_cast %0 : vector<2x8x32xf32> to vector<16x32xf32>
    %2 = arith.mulf %1, %1 : vector<16x32xf32>
    %cst = arith.constant dense<0.000000e+00> : vector<16xf32>
    %3 = vector.multi_reduction <add>, %2, %cst [1] : vector<16x32xf32> to vector<16xf32>
    %4 = vector.shape_cast %3 : vector<16xf32> to vector<16x1xf32>
    %cst_2 = arith.constant 3.200000e+01 : f32
    %5 = vector.broadcast %cst_2 : f32 to vector<16x1xf32>
    %6 = arith.divf %4, %5 : vector<16x1xf32>
    %cst_3 = arith.constant 9.99999974E-6 : f32
    %7 = vector.broadcast %cst_3 : f32 to vector<16x1xf32>
    %8 = arith.addf %6, %7 : vector<16x1xf32>
    %9 = math.rsqrt %8 : vector<16x1xf32>
    %10 = vector.broadcast %9 : vector<16x1xf32> to vector<16x32xf32>
    %11 = arith.mulf %1, %10 : vector<16x32xf32>
    %c0_4 = arith.constant 0 : index
    %c0_5 = arith.constant 0 : index
    %12 = vector.load %arg2[%c0_4, %c0_5] : memref<1x32xf32, #tpu.memory_space<vmem>>, vector<1x32xf32>
    %13 = vector.broadcast %12 : vector<1x32xf32> to vector<16x32xf32>
    %14 = arith.mulf %11, %13 : vector<16x32xf32>
    %15 = arith.truncf %14 : vector<16x32xf32> to vector<16x32xbf16>
    %c0_6 = arith.constant 0 : index
    %c0_7 = arith.constant 0 : index
    %16 = vector.load %arg3[%c0_6, %c0_7] : memref<32x128xbf16, #tpu.memory_space<vmem>>, vector<32x128xbf16>
    %cst_8 = arith.constant dense<0.000000e+00> : vector<16x128xf32>
    %17 = tpu.matmul %15, %16, %cst_8 {dimension_numbers = #tpu.dot_dimension_numbers<[1], [0], [0], [1], [0, 0, 1, 1], [], []>} : vector<16x32xbf16>, vector<32x128xbf16>, vector<16x128xf32> -> vector<16x128xf32>
    %c0_9 = arith.constant 0 : index
    %c0_10 = arith.constant 0 : index
    %18 = vector.load %arg4[%c0_9, %c0_10] : memref<1x128xf32, #tpu.memory_space<vmem>>, vector<1x128xf32>
    %19 = vector.broadcast %18 : vector<1x128xf32> to vector<16x128xf32>
    %20 = arith.addf %17, %19 : vector<16x128xf32>
    %21 = vector.extract_strided_slice %20 {offsets = [0, 0], sizes = [16, 64], strides = [1, 1]} : vector<16x128xf32> to vector<16x64xf32>
    %22 = vector.extract_strided_slice %20 {offsets = [0, 64], sizes = [16, 64], strides = [1, 1]} : vector<16x128xf32> to vector<16x64xf32>
    %23 = vector.shape_cast %21 : vector<16x64xf32> to vector<2x8x64xf32>
    %c0_11 = arith.constant 0 : index
    %c0_12 = arith.constant 0 : index
    %24 = vector.load %arg5[%c0_11, %c0_12] : memref<3x64xf32, #tpu.memory_space<vmem>>, vector<3x64xf32>
    %cst_13 = arith.constant 0.000000e+00 : f32
    %25 = vector.broadcast %cst_13 : f32 to vector<2x8x64xf32>
    %c0_14 = arith.constant 0 : index
    %c0_15 = arith.constant 0 : index
    %26 = vector.load %arg6[%c0_14, %c0_15] : memref<1x64xf32, #tpu.memory_space<vmem>>, vector<1x64xf32>
    %27 = vector.shape_cast %26 : vector<1x64xf32> to vector<1x1x64xf32>
    %28 = vector.broadcast %27 : vector<1x1x64xf32> to vector<2x8x64xf32>
    %29 = arith.addf %25, %28 : vector<2x8x64xf32>
    %cst_16 = arith.constant 0.000000e+00 : f32
    %30 = vector.broadcast %cst_16 : f32 to vector<2x2x64xf32>
    %31 = vector.extract_strided_slice %23 {offsets = [0, 0, 0], sizes = [2, 6, 64], strides = [1, 1, 1]} : vector<2x8x64xf32> to vector<2x6x64xf32>
    %32 = tpu.concatenate %30, %31 in 1 : vector<2x2x64xf32>, vector<2x6x64xf32> -> vector<2x8x64xf32>
    %33 = vector.extract_strided_slice %24 {offsets = [0, 0], sizes = [1, 64], strides = [1, 1]} : vector<3x64xf32> to vector<1x64xf32>
    %34 = vector.shape_cast %33 : vector<1x64xf32> to vector<1x1x64xf32>
    %35 = vector.broadcast %34 : vector<1x1x64xf32> to vector<2x8x64xf32>
    %36 = arith.mulf %35, %32 : vector<2x8x64xf32>
    %37 = arith.addf %29, %36 : vector<2x8x64xf32>
    %cst_17 = arith.constant 0.000000e+00 : f32
    %38 = vector.broadcast %cst_17 : f32 to vector<2x1x64xf32>
    %39 = vector.extract_strided_slice %23 {offsets = [0, 0, 0], sizes = [2, 7, 64], strides = [1, 1, 1]} : vector<2x8x64xf32> to vector<2x7x64xf32>
    %40 = tpu.concatenate %38, %39 in 1 : vector<2x1x64xf32>, vector<2x7x64xf32> -> vector<2x8x64xf32>
    %41 = vector.extract_strided_slice %24 {offsets = [1, 0], sizes = [1, 64], strides = [1, 1]} : vector<3x64xf32> to vector<1x64xf32>
    %42 = vector.shape_cast %41 : vector<1x64xf32> to vector<1x1x64xf32>
    %43 = vector.broadcast %42 : vector<1x1x64xf32> to vector<2x8x64xf32>
    %44 = arith.mulf %43, %40 : vector<2x8x64xf32>
    %45 = arith.addf %37, %44 : vector<2x8x64xf32>
    %46 = vector.extract_strided_slice %24 {offsets = [2, 0], sizes = [1, 64], strides = [1, 1]} : vector<3x64xf32> to vector<1x64xf32>
    %47 = vector.shape_cast %46 : vector<1x64xf32> to vector<1x1x64xf32>
    %48 = vector.broadcast %47 : vector<1x1x64xf32> to vector<2x8x64xf32>
    %49 = arith.mulf %48, %23 : vector<2x8x64xf32>
    %50 = arith.addf %45, %49 : vector<2x8x64xf32>
    %cst_18 = arith.constant 0.000000e+00 : f32
    %51 = vector.broadcast %cst_18 : f32 to vector<2x8x64xf32>
    %52 = arith.subf %51, %50 : vector<2x8x64xf32>
    %53 = math.exp %52 : vector<2x8x64xf32>
    %cst_19 = arith.constant 1.000000e+00 : f32
    %54 = vector.broadcast %cst_19 : f32 to vector<2x8x64xf32>
    %55 = arith.addf %54, %53 : vector<2x8x64xf32>
    %cst_20 = arith.constant 1.000000e+00 : f32
    %56 = vector.broadcast %cst_20 : f32 to vector<2x8x64xf32>
    %57 = arith.divf %56, %55 : vector<2x8x64xf32>
    %58 = arith.mulf %50, %57 : vector<2x8x64xf32>
    %59 = vector.shape_cast %58 : vector<2x8x64xf32> to vector<16x64xf32>
    %60 = arith.truncf %59 : vector<16x64xf32> to vector<16x64xbf16>
    %c0_21 = arith.constant 0 : index
    %c0_22 = arith.constant 0 : index
    %61 = vector.load %arg7[%c0_21, %c0_22] : memref<64x40xbf16, #tpu.memory_space<vmem>>, vector<64x40xbf16>
    %cst_23 = arith.constant dense<0.000000e+00> : vector<16x40xf32>
    %62 = tpu.matmul %60, %61, %cst_23 {dimension_numbers = #tpu.dot_dimension_numbers<[1], [0], [0], [1], [0, 0, 1, 1], [], []>} : vector<16x64xbf16>, vector<64x40xbf16>, vector<16x40xf32> -> vector<16x40xf32>
    %63 = vector.extract_strided_slice %62 {offsets = [0, 0], sizes = [16, 8], strides = [1, 1]} : vector<16x40xf32> to vector<16x8xf32>
    %64 = vector.extract_strided_slice %62 {offsets = [0, 8], sizes = [16, 16], strides = [1, 1]} : vector<16x40xf32> to vector<16x16xf32>
    %65 = vector.extract_strided_slice %62 {offsets = [0, 24], sizes = [16, 16], strides = [1, 1]} : vector<16x40xf32> to vector<16x16xf32>
    %66 = arith.truncf %63 : vector<16x8xf32> to vector<16x8xbf16>
    %c0_24 = arith.constant 0 : index
    %c0_25 = arith.constant 0 : index
    %67 = vector.load %arg8[%c0_24, %c0_25] : memref<8x64xbf16, #tpu.memory_space<vmem>>, vector<8x64xbf16>
    %cst_26 = arith.constant dense<0.000000e+00> : vector<16x64xf32>
    %68 = tpu.matmul %66, %67, %cst_26 {dimension_numbers = #tpu.dot_dimension_numbers<[1], [0], [0], [1], [0, 0, 1, 1], [], []>} : vector<16x8xbf16>, vector<8x64xbf16>, vector<16x64xf32> -> vector<16x64xf32>
    %c0_27 = arith.constant 0 : index
    %c0_28 = arith.constant 0 : index
    %69 = vector.load %arg9[%c0_27, %c0_28] : memref<1x64xf32, #tpu.memory_space<vmem>>, vector<1x64xf32>
    %70 = vector.broadcast %69 : vector<1x64xf32> to vector<16x64xf32>
    %71 = arith.addf %68, %70 : vector<16x64xf32>
    %cst_29 = arith.constant 2.000000e+01 : f32
    %72 = vector.broadcast %cst_29 : f32 to vector<16x64xf32>
    %73 = arith.cmpf ogt, %71, %72 : vector<16x64xf32>
    %cst_30 = arith.constant 2.000000e+01 : f32
    %74 = vector.broadcast %cst_30 : f32 to vector<16x64xf32>
    %75 = arith.minimumf %71, %74 : vector<16x64xf32>
    %76 = math.exp %75 : vector<16x64xf32>
    %77 = math.log1p %76 : vector<16x64xf32>
    %78 = arith.select %73, %71, %77 : vector<16x64xi1>, vector<16x64xf32>
    %c0_31 = arith.constant 0 : index
    %c0_32 = arith.constant 0 : index
    %79 = vector.load %arg10[%c0_31, %c0_32] : memref<16x64xf32, #tpu.memory_space<vmem>>, vector<16x64xf32>
    %80 = math.exp %79 : vector<16x64xf32>
    %cst_33 = arith.constant 0.000000e+00 : f32
    %81 = vector.broadcast %cst_33 : f32 to vector<16x64xf32>
    %82 = arith.subf %81, %80 : vector<16x64xf32>
    %83 = vector.shape_cast %78 : vector<16x64xf32> to vector<16x1x64xf32>
    %84 = vector.shape_cast %82 : vector<16x64xf32> to vector<1x16x64xf32>
    %85 = vector.broadcast %83 : vector<16x1x64xf32> to vector<16x16x64xf32>
    %86 = vector.broadcast %84 : vector<1x16x64xf32> to vector<16x16x64xf32>
    %87 = arith.mulf %85, %86 : vector<16x16x64xf32>
    %88 = math.exp %87 : vector<16x16x64xf32>
    %c0_34 = arith.constant 0 : index
    %c0_35 = arith.constant 0 : index
    %c0_36 = arith.constant 0 : index
    %89 = vector.load %arg14[%c0_34, %c0_35, %c0_36] : memref<16x16x64xf32, #tpu.memory_space<vmem>>, vector<16x16x64xf32>
    tpu.vector_store %arg14[%c0_34, %c0_35, %c0_36], %88 {strides = array<i32>} : memref<16x16x64xf32, #tpu.memory_space<vmem>>, vector<16x16x64xf32>,
    %90 = arith.mulf %78, %59 : vector<16x64xf32>
    %91 = vector.shape_cast %90 : vector<16x64xf32> to vector<16x1x64xf32>
    %92 = vector.shape_cast %64 : vector<16x16xf32> to vector<16x16x1xf32>
    %93 = vector.broadcast %91 : vector<16x1x64xf32> to vector<16x16x64xf32>
    %94 = vector.broadcast %92 : vector<16x16x1xf32> to vector<16x16x64xf32>
    %95 = arith.mulf %93, %94 : vector<16x16x64xf32>
    %c0_37 = arith.constant 0 : index
    %c0_38 = arith.constant 0 : index
    %c0_39 = arith.constant 0 : index
    %96 = vector.load %arg15[%c0_37, %c0_38, %c0_39] : memref<16x16x64xf32, #tpu.memory_space<vmem>>, vector<16x16x64xf32>
    tpu.vector_store %arg15[%c0_37, %c0_38, %c0_39], %95 {strides = array<i32>} : memref<16x16x64xf32, #tpu.memory_space<vmem>>, vector<16x16x64xf32>,
    %cst_40 = arith.constant 0.000000e+00 : f32
    %97 = vector.broadcast %cst_40 : f32 to vector<16x64xf32>
    %cst_41 = arith.constant 0.000000e+00 : f32
    %98 = vector.broadcast %cst_41 : f32 to vector<16x64xf32>
    %c0_i32 = arith.constant 0 : i32
    %c0_i32_42 = arith.constant 0 : i32
    %99 = arith.addi %c0_i32_42, %c0_i32 : i32
    %100 = arith.index_cast %99 : i32 to index
    %c0_43 = arith.constant 0 : index
    %c0_44 = arith.constant 0 : index
    %101 = vector.load %arg14[%100, %c0_43, %c0_44] : memref<16x16x64xf32, #tpu.memory_space<vmem>>, vector<1x16x64xf32>
    %102 = vector.shape_cast %101 : vector<1x16x64xf32> to vector<16x64xf32>
    %103 = arith.mulf %102, %97 : vector<16x64xf32>
    %104 = arith.index_cast %99 : i32 to index
    %c0_45 = arith.constant 0 : index
    %c0_46 = arith.constant 0 : index
    %105 = vector.load %arg15[%104, %c0_45, %c0_46] : memref<16x16x64xf32, #tpu.memory_space<vmem>>, vector<1x16x64xf32>
    %106 = vector.shape_cast %105 : vector<1x16x64xf32> to vector<16x64xf32>
    %107 = arith.addf %103, %106 : vector<16x64xf32>
    %108 = arith.index_cast %99 : i32 to index
    %c0_47 = arith.constant 0 : index
    %c0_48 = arith.constant 0 : index
    %109 = vector.load %arg16[%108, %c0_47, %c0_48] : memref<16x16x64xf32, #tpu.memory_space<vmem>>, vector<1x16x64xf32>
    %110 = vector.shape_cast %109 : vector<1x16x64xf32> to vector<16x64xf32>
    %111 = vector.shape_cast %107 : vector<16x64xf32> to vector<1x16x64xf32>
    tpu.vector_store %arg16[%108, %c0_47, %c0_48], %111 {strides = array<i32>} : memref<16x16x64xf32, #tpu.memory_space<vmem>>, vector<1x16x64xf32>,
    %c8_i32 = arith.constant 8 : i32
    %112 = arith.addi %c8_i32, %c0_i32 : i32
    %113 = arith.index_cast %112 : i32 to index
    %c0_49 = arith.constant 0 : index
    %c0_50 = arith.constant 0 : index
    %114 = vector.load %arg14[%113, %c0_49, %c0_50] : memref<16x16x64xf32, #tpu.memory_space<vmem>>, vector<1x16x64xf32>
    %115 = vector.shape_cast %114 : vector<1x16x64xf32> to vector<16x64xf32>
    %116 = arith.mulf %115, %98 : vector<16x64xf32>
    %117 = arith.index_cast %112 : i32 to index
    %c0_51 = arith.constant 0 : index
    %c0_52 = arith.constant 0 : index
    %118 = vector.load %arg15[%117, %c0_51, %c0_52] : memref<16x16x64xf32, #tpu.memory_space<vmem>>, vector<1x16x64xf32>
    %119 = vector.shape_cast %118 : vector<1x16x64xf32> to vector<16x64xf32>
    %120 = arith.addf %116, %119 : vector<16x64xf32>
    %121 = arith.index_cast %112 : i32 to index
    %c0_53 = arith.constant 0 : index
    %c0_54 = arith.constant 0 : index
    %122 = vector.load %arg16[%121, %c0_53, %c0_54] : memref<16x16x64xf32, #tpu.memory_space<vmem>>, vector<1x16x64xf32>
    %123 = vector.shape_cast %122 : vector<1x16x64xf32> to vector<16x64xf32>
    %124 = vector.shape_cast %120 : vector<16x64xf32> to vector<1x16x64xf32>
    tpu.vector_store %arg16[%121, %c0_53, %c0_54], %124 {strides = array<i32>} : memref<16x16x64xf32, #tpu.memory_space<vmem>>, vector<1x16x64xf32>,
    %c1_i32 = arith.constant 1 : i32
    %c0_i32_55 = arith.constant 0 : i32
    %125 = arith.addi %c0_i32_55, %c1_i32 : i32
    %126 = arith.index_cast %125 : i32 to index
    %c0_56 = arith.constant 0 : index
    %c0_57 = arith.constant 0 : index
    %127 = vector.load %arg14[%126, %c0_56, %c0_57] : memref<16x16x64xf32, #tpu.memory_space<vmem>>, vector<1x16x64xf32>
    %128 = vector.shape_cast %127 : vector<1x16x64xf32> to vector<16x64xf32>
    %129 = arith.mulf %128, %107 : vector<16x64xf32>
    %130 = arith.index_cast %125 : i32 to index
    %c0_58 = arith.constant 0 : index
    %c0_59 = arith.constant 0 : index
    %131 = vector.load %arg15[%130, %c0_58, %c0_59] : memref<16x16x64xf32, #tpu.memory_space<vmem>>, vector<1x16x64xf32>
    %132 = vector.shape_cast %131 : vector<1x16x64xf32> to vector<16x64xf32>
    %133 = arith.addf %129, %132 : vector<16x64xf32>
    %134 = arith.index_cast %125 : i32 to index
    %c0_60 = arith.constant 0 : index
    %c0_61 = arith.constant 0 : index
    %135 = vector.load %arg16[%134, %c0_60, %c0_61] : memref<16x16x64xf32, #tpu.memory_space<vmem>>, vector<1x16x64xf32>
    %136 = vector.shape_cast %135 : vector<1x16x64xf32> to vector<16x64xf32>
    %137 = vector.shape_cast %133 : vector<16x64xf32> to vector<1x16x64xf32>
    tpu.vector_store %arg16[%134, %c0_60, %c0_61], %137 {strides = array<i32>} : memref<16x16x64xf32, #tpu.memory_space<vmem>>, vector<1x16x64xf32>,
    %c8_i32_62 = arith.constant 8 : i32
    %138 = arith.addi %c8_i32_62, %c1_i32 : i32
    %139 = arith.index_cast %138 : i32 to index
    %c0_63 = arith.constant 0 : index
    %c0_64 = arith.constant 0 : index
    %140 = vector.load %arg14[%139, %c0_63, %c0_64] : memref<16x16x64xf32, #tpu.memory_space<vmem>>, vector<1x16x64xf32>
    %141 = vector.shape_cast %140 : vector<1x16x64xf32> to vector<16x64xf32>
    %142 = arith.mulf %141, %120 : vector<16x64xf32>
    %143 = arith.index_cast %138 : i32 to index
    %c0_65 = arith.constant 0 : index
    %c0_66 = arith.constant 0 : index
    %144 = vector.load %arg15[%143, %c0_65, %c0_66] : memref<16x16x64xf32, #tpu.memory_space<vmem>>, vector<1x16x64xf32>
    %145 = vector.shape_cast %144 : vector<1x16x64xf32> to vector<16x64xf32>
    %146 = arith.addf %142, %145 : vector<16x64xf32>
    %147 = arith.index_cast %138 : i32 to index
    %c0_67 = arith.constant 0 : index
    %c0_68 = arith.constant 0 : index
    %148 = vector.load %arg16[%147, %c0_67, %c0_68] : memref<16x16x64xf32, #tpu.memory_space<vmem>>, vector<1x16x64xf32>
    %149 = vector.shape_cast %148 : vector<1x16x64xf32> to vector<16x64xf32>
    %150 = vector.shape_cast %146 : vector<16x64xf32> to vector<1x16x64xf32>
    tpu.vector_store %arg16[%147, %c0_67, %c0_68], %150 {strides = array<i32>} : memref<16x16x64xf32, #tpu.memory_space<vmem>>, vector<1x16x64xf32>,
    %c2_i32 = arith.constant 2 : i32
    %c0_i32_69 = arith.constant 0 : i32
    %151 = arith.addi %c0_i32_69, %c2_i32 : i32
    %152 = arith.index_cast %151 : i32 to index
    %c0_70 = arith.constant 0 : index
    %c0_71 = arith.constant 0 : index
    %153 = vector.load %arg14[%152, %c0_70, %c0_71] : memref<16x16x64xf32, #tpu.memory_space<vmem>>, vector<1x16x64xf32>
    %154 = vector.shape_cast %153 : vector<1x16x64xf32> to vector<16x64xf32>
    %155 = arith.mulf %154, %133 : vector<16x64xf32>
    %156 = arith.index_cast %151 : i32 to index
    %c0_72 = arith.constant 0 : index
    %c0_73 = arith.constant 0 : index
    %157 = vector.load %arg15[%156, %c0_72, %c0_73] : memref<16x16x64xf32, #tpu.memory_space<vmem>>, vector<1x16x64xf32>
    %158 = vector.shape_cast %157 : vector<1x16x64xf32> to vector<16x64xf32>
    %159 = arith.addf %155, %158 : vector<16x64xf32>
    %160 = arith.index_cast %151 : i32 to index
    %c0_74 = arith.constant 0 : index
    %c0_75 = arith.constant 0 : index
    %161 = vector.load %arg16[%160, %c0_74, %c0_75] : memref<16x16x64xf32, #tpu.memory_space<vmem>>, vector<1x16x64xf32>
    %162 = vector.shape_cast %161 : vector<1x16x64xf32> to vector<16x64xf32>
    %163 = vector.shape_cast %159 : vector<16x64xf32> to vector<1x16x64xf32>
    tpu.vector_store %arg16[%160, %c0_74, %c0_75], %163 {strides = array<i32>} : memref<16x16x64xf32, #tpu.memory_space<vmem>>, vector<1x16x64xf32>,
    %c8_i32_76 = arith.constant 8 : i32
    %164 = arith.addi %c8_i32_76, %c2_i32 : i32
    %165 = arith.index_cast %164 : i32 to index
    %c0_77 = arith.constant 0 : index
    %c0_78 = arith.constant 0 : index
    %166 = vector.load %arg14[%165, %c0_77, %c0_78] : memref<16x16x64xf32, #tpu.memory_space<vmem>>, vector<1x16x64xf32>
    %167 = vector.shape_cast %166 : vector<1x16x64xf32> to vector<16x64xf32>
    %168 = arith.mulf %167, %146 : vector<16x64xf32>
    %169 = arith.index_cast %164 : i32 to index
    %c0_79 = arith.constant 0 : index
    %c0_80 = arith.constant 0 : index
    %170 = vector.load %arg15[%169, %c0_79, %c0_80] : memref<16x16x64xf32, #tpu.memory_space<vmem>>, vector<1x16x64xf32>
    %171 = vector.shape_cast %170 : vector<1x16x64xf32> to vector<16x64xf32>
    %172 = arith.addf %168, %171 : vector<16x64xf32>
    %173 = arith.index_cast %164 : i32 to index
    %c0_81 = arith.constant 0 : index
    %c0_82 = arith.constant 0 : index
    %174 = vector.load %arg16[%173, %c0_81, %c0_82] : memref<16x16x64xf32, #tpu.memory_space<vmem>>, vector<1x16x64xf32>
    %175 = vector.shape_cast %174 : vector<1x16x64xf32> to vector<16x64xf32>
    %176 = vector.shape_cast %172 : vector<16x64xf32> to vector<1x16x64xf32>
    tpu.vector_store %arg16[%173, %c0_81, %c0_82], %176 {strides = array<i32>} : memref<16x16x64xf32, #tpu.memory_space<vmem>>, vector<1x16x64xf32>,
    %c3_i32 = arith.constant 3 : i32
    %c0_i32_83 = arith.constant 0 : i32
    %177 = arith.addi %c0_i32_83, %c3_i32 : i32
    %178 = arith.index_cast %177 : i32 to index
    %c0_84 = arith.constant 0 : index
    %c0_85 = arith.constant 0 : index
    %179 = vector.load %arg14[%178, %c0_84, %c0_85] : memref<16x16x64xf32, #tpu.memory_space<vmem>>, vector<1x16x64xf32>
    %180 = vector.shape_cast %179 : vector<1x16x64xf32> to vector<16x64xf32>
    %181 = arith.mulf %180, %159 : vector<16x64xf32>
    %182 = arith.index_cast %177 : i32 to index
    %c0_86 = arith.constant 0 : index
    %c0_87 = arith.constant 0 : index
    %183 = vector.load %arg15[%182, %c0_86, %c0_87] : memref<16x16x64xf32, #tpu.memory_space<vmem>>, vector<1x16x64xf32>
    %184 = vector.shape_cast %183 : vector<1x16x64xf32> to vector<16x64xf32>
    %185 = arith.addf %181, %184 : vector<16x64xf32>
    %186 = arith.index_cast %177 : i32 to index
    %c0_88 = arith.constant 0 : index
    %c0_89 = arith.constant 0 : index
    %187 = vector.load %arg16[%186, %c0_88, %c0_89] : memref<16x16x64xf32, #tpu.memory_space<vmem>>, vector<1x16x64xf32>
    %188 = vector.shape_cast %187 : vector<1x16x64xf32> to vector<16x64xf32>
    %189 = vector.shape_cast %185 : vector<16x64xf32> to vector<1x16x64xf32>
    tpu.vector_store %arg16[%186, %c0_88, %c0_89], %189 {strides = array<i32>} : memref<16x16x64xf32, #tpu.memory_space<vmem>>, vector<1x16x64xf32>,
    %c8_i32_90 = arith.constant 8 : i32
    %190 = arith.addi %c8_i32_90, %c3_i32 : i32
    %191 = arith.index_cast %190 : i32 to index
    %c0_91 = arith.constant 0 : index
    %c0_92 = arith.constant 0 : index
    %192 = vector.load %arg14[%191, %c0_91, %c0_92] : memref<16x16x64xf32, #tpu.memory_space<vmem>>, vector<1x16x64xf32>
    %193 = vector.shape_cast %192 : vector<1x16x64xf32> to vector<16x64xf32>
    %194 = arith.mulf %193, %172 : vector<16x64xf32>
    %195 = arith.index_cast %190 : i32 to index
    %c0_93 = arith.constant 0 : index
    %c0_94 = arith.constant 0 : index
    %196 = vector.load %arg15[%195, %c0_93, %c0_94] : memref<16x16x64xf32, #tpu.memory_space<vmem>>, vector<1x16x64xf32>
    %197 = vector.shape_cast %196 : vector<1x16x64xf32> to vector<16x64xf32>
    %198 = arith.addf %194, %197 : vector<16x64xf32>
    %199 = arith.index_cast %190 : i32 to index
    %c0_95 = arith.constant 0 : index
    %c0_96 = arith.constant 0 : index
    %200 = vector.load %arg16[%199, %c0_95, %c0_96] : memref<16x16x64xf32, #tpu.memory_space<vmem>>, vector<1x16x64xf32>
    %201 = vector.shape_cast %200 : vector<1x16x64xf32> to vector<16x64xf32>
    %202 = vector.shape_cast %198 : vector<16x64xf32> to vector<1x16x64xf32>
    tpu.vector_store %arg16[%199, %c0_95, %c0_96], %202 {strides = array<i32>} : memref<16x16x64xf32, #tpu.memory_space<vmem>>, vector<1x16x64xf32>,
    %c4_i32 = arith.constant 4 : i32
    %c0_i32_97 = arith.constant 0 : i32
    %203 = arith.addi %c0_i32_97, %c4_i32 : i32
    %204 = arith.index_cast %203 : i32 to index
    %c0_98 = arith.constant 0 : index
    %c0_99 = arith.constant 0 : index
    %205 = vector.load %arg14[%204, %c0_98, %c0_99] : memref<16x16x64xf32, #tpu.memory_space<vmem>>, vector<1x16x64xf32>
    %206 = vector.shape_cast %205 : vector<1x16x64xf32> to vector<16x64xf32>
    %207 = arith.mulf %206, %185 : vector<16x64xf32>
    %208 = arith.index_cast %203 : i32 to index
    %c0_100 = arith.constant 0 : index
    %c0_101 = arith.constant 0 : index
    %209 = vector.load %arg15[%208, %c0_100, %c0_101] : memref<16x16x64xf32, #tpu.memory_space<vmem>>, vector<1x16x64xf32>
    %210 = vector.shape_cast %209 : vector<1x16x64xf32> to vector<16x64xf32>
    %211 = arith.addf %207, %210 : vector<16x64xf32>
    %212 = arith.index_cast %203 : i32 to index
    %c0_102 = arith.constant 0 : index
    %c0_103 = arith.constant 0 : index
    %213 = vector.load %arg16[%212, %c0_102, %c0_103] : memref<16x16x64xf32, #tpu.memory_space<vmem>>, vector<1x16x64xf32>
    %214 = vector.shape_cast %213 : vector<1x16x64xf32> to vector<16x64xf32>
    %215 = vector.shape_cast %211 : vector<16x64xf32> to vector<1x16x64xf32>
    tpu.vector_store %arg16[%212, %c0_102, %c0_103], %215 {strides = array<i32>} : memref<16x16x64xf32, #tpu.memory_space<vmem>>, vector<1x16x64xf32>,
    %c8_i32_104 = arith.constant 8 : i32
    %216 = arith.addi %c8_i32_104, %c4_i32 : i32
    %217 = arith.index_cast %216 : i32 to index
    %c0_105 = arith.constant 0 : index
    %c0_106 = arith.constant 0 : index
    %218 = vector.load %arg14[%217, %c0_105, %c0_106] : memref<16x16x64xf32, #tpu.memory_space<vmem>>, vector<1x16x64xf32>
    %219 = vector.shape_cast %218 : vector<1x16x64xf32> to vector<16x64xf32>
    %220 = arith.mulf %219, %198 : vector<16x64xf32>
    %221 = arith.index_cast %216 : i32 to index
    %c0_107 = arith.constant 0 : index
    %c0_108 = arith.constant 0 : index
    %222 = vector.load %arg15[%221, %c0_107, %c0_108] : memref<16x16x64xf32, #tpu.memory_space<vmem>>, vector<1x16x64xf32>
    %223 = vector.shape_cast %222 : vector<1x16x64xf32> to vector<16x64xf32>
    %224 = arith.addf %220, %223 : vector<16x64xf32>
    %225 = arith.index_cast %216 : i32 to index
    %c0_109 = arith.constant 0 : index
    %c0_110 = arith.constant 0 : index
    %226 = vector.load %arg16[%225, %c0_109, %c0_110] : memref<16x16x64xf32, #tpu.memory_space<vmem>>, vector<1x16x64xf32>
    %227 = vector.shape_cast %226 : vector<1x16x64xf32> to vector<16x64xf32>
    %228 = vector.shape_cast %224 : vector<16x64xf32> to vector<1x16x64xf32>
    tpu.vector_store %arg16[%225, %c0_109, %c0_110], %228 {strides = array<i32>} : memref<16x16x64xf32, #tpu.memory_space<vmem>>, vector<1x16x64xf32>,
    %c5_i32 = arith.constant 5 : i32
    %c0_i32_111 = arith.constant 0 : i32
    %229 = arith.addi %c0_i32_111, %c5_i32 : i32
    %230 = arith.index_cast %229 : i32 to index
    %c0_112 = arith.constant 0 : index
    %c0_113 = arith.constant 0 : index
    %231 = vector.load %arg14[%230, %c0_112, %c0_113] : memref<16x16x64xf32, #tpu.memory_space<vmem>>, vector<1x16x64xf32>
    %232 = vector.shape_cast %231 : vector<1x16x64xf32> to vector<16x64xf32>
    %233 = arith.mulf %232, %211 : vector<16x64xf32>
    %234 = arith.index_cast %229 : i32 to index
    %c0_114 = arith.constant 0 : index
    %c0_115 = arith.constant 0 : index
    %235 = vector.load %arg15[%234, %c0_114, %c0_115] : memref<16x16x64xf32, #tpu.memory_space<vmem>>, vector<1x16x64xf32>
    %236 = vector.shape_cast %235 : vector<1x16x64xf32> to vector<16x64xf32>
    %237 = arith.addf %233, %236 : vector<16x64xf32>
    %238 = arith.index_cast %229 : i32 to index
    %c0_116 = arith.constant 0 : index
    %c0_117 = arith.constant 0 : index
    %239 = vector.load %arg16[%238, %c0_116, %c0_117] : memref<16x16x64xf32, #tpu.memory_space<vmem>>, vector<1x16x64xf32>
    %240 = vector.shape_cast %239 : vector<1x16x64xf32> to vector<16x64xf32>
    %241 = vector.shape_cast %237 : vector<16x64xf32> to vector<1x16x64xf32>
    tpu.vector_store %arg16[%238, %c0_116, %c0_117], %241 {strides = array<i32>} : memref<16x16x64xf32, #tpu.memory_space<vmem>>, vector<1x16x64xf32>,
    %c8_i32_118 = arith.constant 8 : i32
    %242 = arith.addi %c8_i32_118, %c5_i32 : i32
    %243 = arith.index_cast %242 : i32 to index
    %c0_119 = arith.constant 0 : index
    %c0_120 = arith.constant 0 : index
    %244 = vector.load %arg14[%243, %c0_119, %c0_120] : memref<16x16x64xf32, #tpu.memory_space<vmem>>, vector<1x16x64xf32>
    %245 = vector.shape_cast %244 : vector<1x16x64xf32> to vector<16x64xf32>
    %246 = arith.mulf %245, %224 : vector<16x64xf32>
    %247 = arith.index_cast %242 : i32 to index
    %c0_121 = arith.constant 0 : index
    %c0_122 = arith.constant 0 : index
    %248 = vector.load %arg15[%247, %c0_121, %c0_122] : memref<16x16x64xf32, #tpu.memory_space<vmem>>, vector<1x16x64xf32>
    %249 = vector.shape_cast %248 : vector<1x16x64xf32> to vector<16x64xf32>
    %250 = arith.addf %246, %249 : vector<16x64xf32>
    %251 = arith.index_cast %242 : i32 to index
    %c0_123 = arith.constant 0 : index
    %c0_124 = arith.constant 0 : index
    %252 = vector.load %arg16[%251, %c0_123, %c0_124] : memref<16x16x64xf32, #tpu.memory_space<vmem>>, vector<1x16x64xf32>
    %253 = vector.shape_cast %252 : vector<1x16x64xf32> to vector<16x64xf32>
    %254 = vector.shape_cast %250 : vector<16x64xf32> to vector<1x16x64xf32>
    tpu.vector_store %arg16[%251, %c0_123, %c0_124], %254 {strides = array<i32>} : memref<16x16x64xf32, #tpu.memory_space<vmem>>, vector<1x16x64xf32>,
    %c6_i32 = arith.constant 6 : i32
    %c0_i32_125 = arith.constant 0 : i32
    %255 = arith.addi %c0_i32_125, %c6_i32 : i32
    %256 = arith.index_cast %255 : i32 to index
    %c0_126 = arith.constant 0 : index
    %c0_127 = arith.constant 0 : index
    %257 = vector.load %arg14[%256, %c0_126, %c0_127] : memref<16x16x64xf32, #tpu.memory_space<vmem>>, vector<1x16x64xf32>
    %258 = vector.shape_cast %257 : vector<1x16x64xf32> to vector<16x64xf32>
    %259 = arith.mulf %258, %237 : vector<16x64xf32>
    %260 = arith.index_cast %255 : i32 to index
    %c0_128 = arith.constant 0 : index
    %c0_129 = arith.constant 0 : index
    %261 = vector.load %arg15[%260, %c0_128, %c0_129] : memref<16x16x64xf32, #tpu.memory_space<vmem>>, vector<1x16x64xf32>
    %262 = vector.shape_cast %261 : vector<1x16x64xf32> to vector<16x64xf32>
    %263 = arith.addf %259, %262 : vector<16x64xf32>
    %264 = arith.index_cast %255 : i32 to index
    %c0_130 = arith.constant 0 : index
    %c0_131 = arith.constant 0 : index
    %265 = vector.load %arg16[%264, %c0_130, %c0_131] : memref<16x16x64xf32, #tpu.memory_space<vmem>>, vector<1x16x64xf32>
    %266 = vector.shape_cast %265 : vector<1x16x64xf32> to vector<16x64xf32>
    %267 = vector.shape_cast %263 : vector<16x64xf32> to vector<1x16x64xf32>
    tpu.vector_store %arg16[%264, %c0_130, %c0_131], %267 {strides = array<i32>} : memref<16x16x64xf32, #tpu.memory_space<vmem>>, vector<1x16x64xf32>,
    %c8_i32_132 = arith.constant 8 : i32
    %268 = arith.addi %c8_i32_132, %c6_i32 : i32
    %269 = arith.index_cast %268 : i32 to index
    %c0_133 = arith.constant 0 : index
    %c0_134 = arith.constant 0 : index
    %270 = vector.load %arg14[%269, %c0_133, %c0_134] : memref<16x16x64xf32, #tpu.memory_space<vmem>>, vector<1x16x64xf32>
    %271 = vector.shape_cast %270 : vector<1x16x64xf32> to vector<16x64xf32>
    %272 = arith.mulf %271, %250 : vector<16x64xf32>
    %273 = arith.index_cast %268 : i32 to index
    %c0_135 = arith.constant 0 : index
    %c0_136 = arith.constant 0 : index
    %274 = vector.load %arg15[%273, %c0_135, %c0_136] : memref<16x16x64xf32, #tpu.memory_space<vmem>>, vector<1x16x64xf32>
    %275 = vector.shape_cast %274 : vector<1x16x64xf32> to vector<16x64xf32>
    %276 = arith.addf %272, %275 : vector<16x64xf32>
    %277 = arith.index_cast %268 : i32 to index
    %c0_137 = arith.constant 0 : index
    %c0_138 = arith.constant 0 : index
    %278 = vector.load %arg16[%277, %c0_137, %c0_138] : memref<16x16x64xf32, #tpu.memory_space<vmem>>, vector<1x16x64xf32>
    %279 = vector.shape_cast %278 : vector<1x16x64xf32> to vector<16x64xf32>
    %280 = vector.shape_cast %276 : vector<16x64xf32> to vector<1x16x64xf32>
    tpu.vector_store %arg16[%277, %c0_137, %c0_138], %280 {strides = array<i32>} : memref<16x16x64xf32, #tpu.memory_space<vmem>>, vector<1x16x64xf32>,
    %c7_i32 = arith.constant 7 : i32
    %c0_i32_139 = arith.constant 0 : i32
    %281 = arith.addi %c0_i32_139, %c7_i32 : i32
    %282 = arith.index_cast %281 : i32 to index
    %c0_140 = arith.constant 0 : index
    %c0_141 = arith.constant 0 : index
    %283 = vector.load %arg14[%282, %c0_140, %c0_141] : memref<16x16x64xf32, #tpu.memory_space<vmem>>, vector<1x16x64xf32>
    %284 = vector.shape_cast %283 : vector<1x16x64xf32> to vector<16x64xf32>
    %285 = arith.mulf %284, %263 : vector<16x64xf32>
    %286 = arith.index_cast %281 : i32 to index
    %c0_142 = arith.constant 0 : index
    %c0_143 = arith.constant 0 : index
    %287 = vector.load %arg15[%286, %c0_142, %c0_143] : memref<16x16x64xf32, #tpu.memory_space<vmem>>, vector<1x16x64xf32>
    %288 = vector.shape_cast %287 : vector<1x16x64xf32> to vector<16x64xf32>
    %289 = arith.addf %285, %288 : vector<16x64xf32>
    %290 = arith.index_cast %281 : i32 to index
    %c0_144 = arith.constant 0 : index
    %c0_145 = arith.constant 0 : index
    %291 = vector.load %arg16[%290, %c0_144, %c0_145] : memref<16x16x64xf32, #tpu.memory_space<vmem>>, vector<1x16x64xf32>
    %292 = vector.shape_cast %291 : vector<1x16x64xf32> to vector<16x64xf32>
    %293 = vector.shape_cast %289 : vector<16x64xf32> to vector<1x16x64xf32>
    tpu.vector_store %arg16[%290, %c0_144, %c0_145], %293 {strides = array<i32>} : memref<16x16x64xf32, #tpu.memory_space<vmem>>, vector<1x16x64xf32>,
    %c8_i32_146 = arith.constant 8 : i32
    %294 = arith.addi %c8_i32_146, %c7_i32 : i32
    %295 = arith.index_cast %294 : i32 to index
    %c0_147 = arith.constant 0 : index
    %c0_148 = arith.constant 0 : index
    %296 = vector.load %arg14[%295, %c0_147, %c0_148] : memref<16x16x64xf32, #tpu.memory_space<vmem>>, vector<1x16x64xf32>
    %297 = vector.shape_cast %296 : vector<1x16x64xf32> to vector<16x64xf32>
    %298 = arith.mulf %297, %276 : vector<16x64xf32>
    %299 = arith.index_cast %294 : i32 to index
    %c0_149 = arith.constant 0 : index
    %c0_150 = arith.constant 0 : index
    %300 = vector.load %arg15[%299, %c0_149, %c0_150] : memref<16x16x64xf32, #tpu.memory_space<vmem>>, vector<1x16x64xf32>
    %301 = vector.shape_cast %300 : vector<1x16x64xf32> to vector<16x64xf32>
    %302 = arith.addf %298, %301 : vector<16x64xf32>
    %303 = arith.index_cast %294 : i32 to index
    %c0_151 = arith.constant 0 : index
    %c0_152 = arith.constant 0 : index
    %304 = vector.load %arg16[%303, %c0_151, %c0_152] : memref<16x16x64xf32, #tpu.memory_space<vmem>>, vector<1x16x64xf32>
    %305 = vector.shape_cast %304 : vector<1x16x64xf32> to vector<16x64xf32>
    %306 = vector.shape_cast %302 : vector<16x64xf32> to vector<1x16x64xf32>
    tpu.vector_store %arg16[%303, %c0_151, %c0_152], %306 {strides = array<i32>} : memref<16x16x64xf32, #tpu.memory_space<vmem>>, vector<1x16x64xf32>,
    %c8_i32_153 = arith.constant 8 : i32
    %c0_154 = arith.constant 0 : index
    %c0_155 = arith.constant 0 : index
    %c0_156 = arith.constant 0 : index
    %307 = vector.load %arg16[%c0_154, %c0_155, %c0_156] : memref<16x16x64xf32, #tpu.memory_space<vmem>>, vector<16x16x64xf32>
    %308 = vector.shape_cast %65 : vector<16x16xf32> to vector<16x16x1xf32>
    %309 = vector.broadcast %308 : vector<16x16x1xf32> to vector<16x16x64xf32>
    %310 = arith.mulf %307, %309 : vector<16x16x64xf32>
    %cst_157 = arith.constant dense<0.000000e+00> : vector<16x64xf32>
    %311 = vector.multi_reduction <add>, %310, %cst_157 [1] : vector<16x16x64xf32> to vector<16x64xf32>
    %cst_158 = arith.constant 0.000000e+00 : f32
    %312 = vector.broadcast %cst_158 : f32 to vector<16x64xf32>
    %313 = arith.subf %312, %22 : vector<16x64xf32>
    %314 = math.exp %313 : vector<16x64xf32>
    %cst_159 = arith.constant 1.000000e+00 : f32
    %315 = vector.broadcast %cst_159 : f32 to vector<16x64xf32>
    %316 = arith.addf %315, %314 : vector<16x64xf32>
    %cst_160 = arith.constant 1.000000e+00 : f32
    %317 = vector.broadcast %cst_160 : f32 to vector<16x64xf32>
    %318 = arith.divf %317, %316 : vector<16x64xf32>
    %319 = arith.mulf %22, %318 : vector<16x64xf32>
    %320 = arith.mulf %311, %319 : vector<16x64xf32>
    %321 = arith.truncf %320 : vector<16x64xf32> to vector<16x64xbf16>
    %c0_161 = arith.constant 0 : index
    %c0_162 = arith.constant 0 : index
    %322 = vector.load %arg11[%c0_161, %c0_162] : memref<64x32xbf16, #tpu.memory_space<vmem>>, vector<64x32xbf16>
    %cst_163 = arith.constant dense<0.000000e+00> : vector<16x32xf32>
    %323 = tpu.matmul %321, %322, %cst_163 {dimension_numbers = #tpu.dot_dimension_numbers<[1], [0], [0], [1], [0, 0, 1, 1], [], []>} : vector<16x64xbf16>, vector<64x32xbf16>, vector<16x32xf32> -> vector<16x32xf32>
    %c0_164 = arith.constant 0 : index
    %c0_165 = arith.constant 0 : index
    %324 = vector.load %arg12[%c0_164, %c0_165] : memref<1x32xf32, #tpu.memory_space<vmem>>, vector<1x32xf32>
    %325 = vector.broadcast %324 : vector<1x32xf32> to vector<16x32xf32>
    %326 = arith.addf %323, %325 : vector<16x32xf32>
    %327 = arith.addf %326, %1 : vector<16x32xf32>
    %328 = vector.shape_cast %327 : vector<16x32xf32> to vector<2x8x32xf32>
    %c0_166 = arith.constant 0 : index
    %c0_167 = arith.constant 0 : index
    %c0_168 = arith.constant 0 : index
    %329 = vector.load %arg13[%c0_166, %c0_167, %c0_168] : memref<2x8x32xf32, #tpu.memory_space<vmem>>, vector<2x8x32xf32>
    tpu.vector_store %arg13[%c0_166, %c0_167, %c0_168], %328 {strides = array<i32>} : memref<2x8x32xf32, #tpu.memory_space<vmem>>, vector<2x8x32xf32>,
    return
  }
  func.func @transform_0(%arg0: i32) -> (i32, i32, i32) {
    %c0_i32 = arith.constant 0 : i32
    %c0_i32_0 = arith.constant 0 : i32
    %c0_i32_1 = arith.constant 0 : i32
    return %arg0, %c0_i32, %c0_i32_0 : i32, i32, i32
  }
  func.func @transform_1(%arg0: i32) -> (i32, i32) {
    %c0_i32 = arith.constant 0 : i32
    %c0_i32_0 = arith.constant 0 : i32
    %c0_i32_1 = arith.constant 0 : i32
    return %c0_i32, %c0_i32_0 : i32, i32
  }
  func.func @transform_2(%arg0: i32) -> (i32, i32) {
    %c0_i32 = arith.constant 0 : i32
    %c0_i32_0 = arith.constant 0 : i32
    %c0_i32_1 = arith.constant 0 : i32
    return %c0_i32, %c0_i32_0 : i32, i32
  }
  func.func @transform_3(%arg0: i32) -> (i32, i32) {
    %c0_i32 = arith.constant 0 : i32
    %c0_i32_0 = arith.constant 0 : i32
    %c0_i32_1 = arith.constant 0 : i32
    return %c0_i32, %c0_i32_0 : i32, i32
  }
  func.func @transform_4(%arg0: i32) -> (i32, i32) {
    %c0_i32 = arith.constant 0 : i32
    %c0_i32_0 = arith.constant 0 : i32
    %c0_i32_1 = arith.constant 0 : i32
    return %c0_i32, %c0_i32_0 : i32, i32
  }
  func.func @transform_5(%arg0: i32) -> (i32, i32) {
    %c0_i32 = arith.constant 0 : i32
    %c0_i32_0 = arith.constant 0 : i32
    %c0_i32_1 = arith.constant 0 : i32
    return %c0_i32, %c0_i32_0 : i32, i32
  }
  func.func @transform_6(%arg0: i32) -> (i32, i32) {
    %c0_i32 = arith.constant 0 : i32
    %c0_i32_0 = arith.constant 0 : i32
    %c0_i32_1 = arith.constant 0 : i32
    return %c0_i32, %c0_i32_0 : i32, i32
  }
  func.func @transform_7(%arg0: i32) -> (i32, i32) {
    %c0_i32 = arith.constant 0 : i32
    %c0_i32_0 = arith.constant 0 : i32
    %c0_i32_1 = arith.constant 0 : i32
    return %c0_i32, %c0_i32_0 : i32, i32
  }
  func.func @transform_8(%arg0: i32) -> (i32, i32) {
    %c0_i32 = arith.constant 0 : i32
    %c0_i32_0 = arith.constant 0 : i32
    %c0_i32_1 = arith.constant 0 : i32
    return %c0_i32, %c0_i32_0 : i32, i32
  }
  func.func @transform_9(%arg0: i32) -> (i32, i32) {
    %c0_i32 = arith.constant 0 : i32
    %c0_i32_0 = arith.constant 0 : i32
    %c0_i32_1 = arith.constant 0 : i32
    return %c0_i32, %c0_i32_0 : i32, i32
  }
  func.func @transform_10(%arg0: i32) -> (i32, i32) {
    %c0_i32 = arith.constant 0 : i32
    %c0_i32_0 = arith.constant 0 : i32
    %c0_i32_1 = arith.constant 0 : i32
    return %c0_i32, %c0_i32_0 : i32, i32
  }
  func.func @transform_11(%arg0: i32) -> (i32, i32) {
    %c0_i32 = arith.constant 0 : i32
    %c0_i32_0 = arith.constant 0 : i32
    %c0_i32_1 = arith.constant 0 : i32
    return %c0_i32, %c0_i32_0 : i32, i32
  }
  func.func @transform_12(%arg0: i32) -> (i32, i32, i32) {
    %c0_i32 = arith.constant 0 : i32
    %c0_i32_0 = arith.constant 0 : i32
    %c0_i32_1 = arith.constant 0 : i32
    return %arg0, %c0_i32, %c0_i32_0 : i32, i32, i32
  }
}

</mosaic_0001>

<llo_original>
// kernel: tpu_custom_call.1
$region0: #{tpu_custom_call.1}
  #allocation0 [shape = 'u32[]', space=smem, size = 0x4, offset = 0x4, fixed_abs, tag = 'smem constant byte address 0x4 - core index']
  #allocation1 [shape = 'u32[144,128]{1,0:T(1,128)}', space=vmem, size = 0x12000, scoped, tag = 'internal scratch']
  #allocation2 [shape = 'f32[16,16,64]{2,1,0:T(8,128)}', space=vmem, size = 0x20000, scoped, tag = 'scratch operand']
  #allocation3 [shape = 'f32[16,16,64]{2,1,0:T(8,128)}', space=vmem, size = 0x20000, scoped, tag = 'scratch operand']
  #allocation4 [shape = 'f32[16,16,64]{2,1,0:T(8,128)}', space=vmem, size = 0x20000, scoped, tag = 'scratch operand']
  %s0 = inlined_call_operand.vmem [shape: f32[2,8,32], index: 0, kind: input, shape index: {}]
  %s1 = inlined_call_operand.vmem [shape: f32[1,32], index: 1, kind: input, shape index: {}]
  %s2 = inlined_call_operand.vmem [shape: bf16[32,128], index: 2, kind: input, shape index: {}]
  %s3 = inlined_call_operand.vmem [shape: f32[1,128], index: 3, kind: input, shape index: {}]
  %s4 = inlined_call_operand.vmem [shape: f32[3,64], index: 4, kind: input, shape index: {}]
  %s5 = inlined_call_operand.vmem [shape: f32[1,64], index: 5, kind: input, shape index: {}]
  %s6 = inlined_call_operand.vmem [shape: bf16[64,40], index: 6, kind: input, shape index: {}]
  %s7 = inlined_call_operand.vmem [shape: bf16[8,64], index: 7, kind: input, shape index: {}]
  %s8 = inlined_call_operand.vmem [shape: f32[1,64], index: 8, kind: input, shape index: {}]
  %s9 = inlined_call_operand.vmem [shape: f32[16,64], index: 9, kind: input, shape index: {}]
  %s10 = inlined_call_operand.vmem [shape: bf16[64,32], index: 10, kind: input, shape index: {}]
  %s11 = inlined_call_operand.vmem [shape: f32[1,32], index: 11, kind: input, shape index: {}]
  %s12 = inlined_call_operand.hbm [shape: f32[2,8,32], index: 12, kind: output, shape index: {}]
  %s13 = sld [smem:[#allocation0]]
  $region58: #{tpu_custom_call.1} parent=0
    _
  %s15 = ssub.s32 1, %s13
  %s16 = scalar_select 0, %s15, %s13
  $region1: #{tpu_custom_call.1} parent=0
    #allocation5 [shape = 'u8[8192]{0}', space=vmem, size = 0x2000, scoped, tag = 'output window, operand 0, single buffered']
    #allocation6 [shape = 's32[1]{0}', space=sflag, size = 0x4, scoped, tag = 'scoped memory for tpu_custom_call.1']
    %17 = vsyncpa [#allocation6], 0
    // Predicated region
    $region2: #{tpu_custom_call.1} parent=1 // pred_check
      _
    $region3: #{tpu_custom_call.1} parent=1 // pred_check_branch
      %19 = sbr.rel (0) target = $region5
    $region4: #{tpu_custom_call.1} parent=1 // pred_region
      _
    $region5: #{tpu_custom_call.1} parent=1 // pred_fallthru
      _
    // Predicated region
    $region6: #{tpu_custom_call.1} parent=1 // pred_check
      _
    $region7: #{tpu_custom_call.1} parent=1 // pred_check_branch
      %21 = sbr.rel (0) target = $region9
    $region8: #{tpu_custom_call.1} parent=1 // pred_region
      _
    $region9: #{tpu_custom_call.1} parent=1 // pred_fallthru
      _
    // Predicated region
    $region10: #{tpu_custom_call.1} parent=1 // pred_check
      _
    $region11: #{tpu_custom_call.1} parent=1 // pred_check_branch
      %23 = sbr.rel (0) target = $region13
    $region12: #{tpu_custom_call.1} parent=1 // pred_region
      _
    $region13: #{tpu_custom_call.1} parent=1 // pred_fallthru
      _
    // Predicated region
    $region14: #{tpu_custom_call.1} parent=1 // pred_check
      _
    $region15: #{tpu_custom_call.1} parent=1 // pred_check_branch
      %25 = sbr.rel (0) target = $region17
    $region16: #{tpu_custom_call.1} parent=1 // pred_region
      _
    $region17: #{tpu_custom_call.1} parent=1 // pred_fallthru
      _
    // Predicated region
    $region18: #{tpu_custom_call.1} parent=1 // pred_check
      _
    $region19: #{tpu_custom_call.1} parent=1 // pred_check_branch
      %27 = sbr.rel (0) target = $region21
    $region20: #{tpu_custom_call.1} parent=1 // pred_region
      _
    $region21: #{tpu_custom_call.1} parent=1 // pred_fallthru
      _
    // Predicated region
    $region22: #{tpu_custom_call.1} parent=1 // pred_check
      _
    $region23: #{tpu_custom_call.1} parent=1 // pred_check_branch
      %29 = sbr.rel (0) target = $region25
    $region24: #{tpu_custom_call.1} parent=1 // pred_region
      _
    $region25: #{tpu_custom_call.1} parent=1 // pred_fallthru
      _
    // Predicated region
    $region26: #{tpu_custom_call.1} parent=1 // pred_check
      _
    $region27: #{tpu_custom_call.1} parent=1 // pred_check_branch
      %31 = sbr.rel (0) target = $region29
    $region28: #{tpu_custom_call.1} parent=1 // pred_region
      _
    $region29: #{tpu_custom_call.1} parent=1 // pred_fallthru
      _
    // Predicated region
    $region30: #{tpu_custom_call.1} parent=1 // pred_check
      _
    $region31: #{tpu_custom_call.1} parent=1 // pred_check_branch
      %33 = sbr.rel (0) target = $region33
    $region32: #{tpu_custom_call.1} parent=1 // pred_region
      _
    $region33: #{tpu_custom_call.1} parent=1 // pred_fallthru
      _
    // Predicated region
    $region34: #{tpu_custom_call.1} parent=1 // pred_check
      _
    $region35: #{tpu_custom_call.1} parent=1 // pred_check_branch
      %35 = sbr.rel (0) target = $region37
    $region36: #{tpu_custom_call.1} parent=1 // pred_region
      _
    $region37: #{tpu_custom_call.1} parent=1 // pred_fallthru
      _
    // Predicated region
    $region38: #{tpu_custom_call.1} parent=1 // pred_check
      _
    $region39: #{tpu_custom_call.1} parent=1 // pred_check_branch
      %37 = sbr.rel (0) target = $region41
    $region40: #{tpu_custom_call.1} parent=1 // pred_region
      _
    $region41: #{tpu_custom_call.1} parent=1 // pred_fallthru
      _
    // Predicated region
    $region42: #{tpu_custom_call.1} parent=1 // pred_check
      _
    $region43: #{tpu_custom_call.1} parent=1 // pred_check_branch
      %39 = sbr.rel (0) target = $region45
    $region44: #{tpu_custom_call.1} parent=1 // pred_region
      _
    $region45: #{tpu_custom_call.1} parent=1 // pred_fallthru
      _
    // Predicated region
    $region46: #{tpu_custom_call.1} parent=1 // pred_check
      _
    $region47: #{tpu_custom_call.1} parent=1 // pred_check_branch
      %41 = sbr.rel (0) target = $region49
    $region48: #{tpu_custom_call.1} parent=1 // pred_region
      _
    $region49: #{tpu_custom_call.1} parent=1 // pred_fallthru
      _
    %v43 = vld [vmem:[%s0] sm:$0xff]
    %v44 = vld [vmem:[%s0 + $0x8] sm:$0xff]
    %v45 = vmul.f32 %v43, %v43
    %v46 = vmul.f32 %v44, %v44
    %vm47 = vcmask 261120
    %v48 = vsel %vm47, %v45, 0.0
    %49 = vadd.xlane.f32.xlu0 %v48
    %v50 = vpop.xlane.xlu0 %49
    %v51 = vsel %vm47, %v46, 0.0
    %52 = vadd.xlane.f32.xlu0 %v51
    %v53 = vpop.xlane.xlu0 %52
    %v54 = vrcp.pop 32.0
    %v55 = vmul.f32 %v50, %v54
    %v56 = vmul.f32 %v53, %v54
    %v57 = vadd.f32 %v55, 1e-05
    %v58 = vadd.f32 %v56, 1e-05
    %v59 = vrsqrt.pop %v57
    %v60 = vrsqrt.pop %v58
    %v61 = vmul.f32 %v43, %v59
    %v62 = vmul.f32 %v44, %v60
    %v63 = vld [vmem:[%s1] sm:$0x1]
    %v65 = vlaneseq
    %v66 = vshrl.u32 %v65, 7
    %v67 = vsub.s32 0, %v66
    %v68 = vrot.slane %v63, %v67
    %v70 = vmul.f32 %v61, %v68
    %v71 = vmul.f32 %v62, %v68
    %v72 = vpack.c.bf16 %v71, %v70
    %v73 = vld [vmem:[%s2] sm:$0xf]
    %v74 = vld [vmem:[%s2 + $0x4] sm:$0xf]
    %v75 = vld [vmem:[%s2 + $0x8] sm:$0xf]
    %v76 = vld [vmem:[%s2 + $0xc] sm:$0xf]
    %v77 = vld [vmem:[%s3] sm:$0x1]
    %v79 = vlaneseq
    %v80 = vshrl.u32 %v79, 7
    %v81 = vsub.s32 0, %v80
    %v82 = vrot.slane %v77, %v81
    %v88 = vunpack.c.l.b16 %v73
    %v89 = vunpack.c.l.b16 %v74
    %v90 = vunpack.c.l.b16 %v75
    %v91 = vunpack.c.l.b16 %v76
    %v92 = vpack.c.b16 %v89, %v88
    %v93 = vpack.c.b16 %v91, %v90
    %v97 = vsel %vm47, %v72, 0
    %99 = vmatprep.subr.bf16.mxu0 0
    %100 = vmatpush1.bf16.msra.mxu0 0
    %101 = vmatprep.subr.bf16.mxu0 0
    %102 = vmatpush1.bf16.msra.mxu0 0
    %103 = vmatprep.subr.bf16.mxu0 0
    %104 = vmatpush1.bf16.msra.mxu0 0
    %105 = vmatprep.subr.bf16.mxu0 0
    %106 = vmatpush1.bf16.msra.mxu0 0
    %107 = vmatprep.subr.bf16.mxu0 0
    %108 = vmatpush1.bf16.msra.mxu0 0
    %109 = vmatprep.subr.bf16.mxu0 0
    %110 = vmatpush1.bf16.msra.mxu0 0
    %111 = vmatprep.subr.bf16.mxu0 0
    %112 = vmatpush1.bf16.msra.mxu0 %v93
    %113 = vmatprep.subr.bf16.mxu0 0
    %114 = vmatpush1.bf16.msra.mxu0 %v92
    %115 = vmatprep.subr.bf16.mxu0 0
    %116 = vmatpush2.bf16.msra.mxu0 0
    %117 = vmatprep.subr.bf16.mxu0 0
    %118 = vmatpush2.bf16.msra.mxu0 0
    %119 = vmatprep.subr.bf16.mxu0 0
    %120 = vmatpush2.bf16.msra.mxu0 0
    %121 = vmatprep.subr.bf16.mxu0 0
    %122 = vmatpush2.bf16.msra.mxu0 0
    %123 = vmatprep.subr.bf16.mxu0 0
    %124 = vmatpush2.bf16.msra.mxu0 0
    %125 = vmatprep.subr.bf16.mxu0 0
    %126 = vmatpush2.bf16.msra.mxu0 0
    %127 = vmatprep.subr.bf16.mxu0 0
    %128 = vmatpush2.bf16.msra.mxu0 0
    %129 = vmatprep.subr.bf16.mxu0 0
    %130 = vmatpush2.bf16.msra.mxu0 0
    %131 = vmatprep.mubr.bf16.mxu0 0
    %132 = vmatmul.mubr.bf16.gmra.mxu0 %v97
    %v133 = vpop.f32.mrf.mxu0
    %v134 = vadd.f32 %v82, %v133
    %v135 = vpop.f32.mrf.mxu0
    %v136 = vpop.f32.mrf.mxu0
    %v137 = vadd.f32 %v82, %v136
    %v138 = vpop.f32.mrf.mxu0
    %139 = vdwg.mxu0
    %v140 = vld [vmem:[%s4] sm:$0x7]
    %v141 = vld [vmem:[%s5] sm:$0x1]
    %v143 = vlaneseq
    %v144 = vshrl.u32 %v143, 7
    %v145 = vsub.s32 0, %v144
    %v146 = vrot.slane %v141, %v145
    %v148 = vadd.f32 %v146, 0.0
    %v151 = vrot.slane %v134, 6
    %v152 = vrot.slane %v137, 6
    %vm155 = vcmask 1041408
    %v156 = vsel %vm155, 0.0, %v151
    %v157 = vsel %vm155, 0.0, %v152
    %v158 = vlaneseq
    %v159 = vshrl.u32 %v158, 7
    %v160 = vsub.s32 0, %v159
    %v161 = vrot.slane %v140, %v160
    %v162 = vmul.f32 %v161, %v156
    %v163 = vmul.f32 %v161, %v157
    %v164 = vadd.f32 %v148, %v162
    %v165 = vadd.f32 %v148, %v163
    %v166 = vrot.slane %v134, 7
    %v167 = vrot.slane %v137, 7
    %vm170 = vcmask 1040384
    %v171 = vsel %vm170, 0.0, %v166
    %v172 = vsel %vm170, 0.0, %v167
    %v173 = vlaneseq
    %v174 = vshrl.u32 %v173, 7
    %v175 = vsub.s32 1, %v174
    %v176 = vrot.slane %v140, %v175
    %v177 = vmul.f32 %v176, %v171
    %v178 = vmul.f32 %v176, %v172
    %v179 = vadd.f32 %v164, %v177
    %v180 = vadd.f32 %v165, %v178
    %v181 = vlaneseq
    %v182 = vshrl.u32 %v181, 7
    %v183 = vsub.s32 2, %v182
    %v184 = vrot.slane %v140, %v183
    %v185 = vmul.f32 %v184, %v134
    %v186 = vmul.f32 %v184, %v137
    %v187 = vadd.f32 %v179, %v185
    %v188 = vadd.f32 %v180, %v186
    %v189 = vsub.f32 0.0, %v187
    %v190 = vsub.f32 0.0, %v188
    %v191 = vmul.f32 %v189, 1.442695
    %v192 = vpow.pop %v191
    %v193 = vmul.f32 %v190, 1.442695
    %v194 = vpow.pop %v193
    %v195 = vadd.f32 %v192, 1.0
    %v196 = vadd.f32 %v194, 1.0
    %v197 = vrcp.pop %v195
    %v198 = vmul.f32 1.0, %v197
    %v199 = vrcp.pop %v196
    %v200 = vmul.f32 1.0, %v199
    %v201 = vmul.f32 %v187, %v198
    %v202 = vmul.f32 %v188, %v200
    %v203 = vpack.c.bf16 %v202, %v201
    %v204 = vld [vmem:[%s6] sm:$0xf]
    %v205 = vld [vmem:[%s6 + $0x4] sm:$0xf]
    %v206 = vld [vmem:[%s6 + $0x8] sm:$0xf]
    %v207 = vld [vmem:[%s6 + $0xc] sm:$0xf]
    %v208 = vld [vmem:[%s6 + $0x10] sm:$0xf]
    %v209 = vld [vmem:[%s6 + $0x14] sm:$0xf]
    %v210 = vld [vmem:[%s6 + $0x18] sm:$0xf]
    %v211 = vld [vmem:[%s6 + $0x1c] sm:$0xf]
    %v220 = vunpack.c.l.b16 %v204
    %v221 = vunpack.c.l.b16 %v205
    %v222 = vunpack.c.l.b16 %v206
    %v223 = vunpack.c.l.b16 %v207
    %v224 = vunpack.c.l.b16 %v208
    %v225 = vunpack.c.l.b16 %v209
    %v226 = vunpack.c.l.b16 %v210
    %v227 = vunpack.c.l.b16 %v211
    %v228 = vpack.c.b16 %v221, %v220
    %v229 = vpack.c.b16 %v223, %v222
    %v230 = vpack.c.b16 %v225, %v224
    %v231 = vpack.c.b16 %v227, %v226
    %vm236 = vcmask 523264
    %v238 = vsel %vm236, %v203, 0
    %240 = vmatprep.subr.bf16.mxu0 0
    %241 = vmatpush1.bf16.msra.mxu0 0
    %242 = vmatprep.subr.bf16.mxu0 0
    %243 = vmatpush1.bf16.msra.mxu0 0
    %244 = vmatprep.subr.bf16.mxu0 0
    %245 = vmatpush1.bf16.msra.mxu0 0
    %246 = vmatprep.subr.bf16.mxu0 0
    %247 = vmatpush1.bf16.msra.mxu0 0
    %248 = vmatprep.subr.bf16.mxu0 0
    %249 = vmatpush1.bf16.msra.mxu0 %v231
    %250 = vmatprep.subr.bf16.mxu0 0
    %251 = vmatpush1.bf16.msra.mxu0 %v230
    %252 = vmatprep.subr.bf16.mxu0 0
    %253 = vmatpush1.bf16.msra.mxu0 %v229
    %254 = vmatprep.subr.bf16.mxu0 0
    %255 = vmatpush1.bf16.msra.mxu0 %v228
    %256 = vmatprep.subr.bf16.mxu0 0
    %257 = vmatpush2.bf16.msra.mxu0 0
    %258 = vmatprep.subr.bf16.mxu0 0
    %259 = vmatpush2.bf16.msra.mxu0 0
    %260 = vmatprep.subr.bf16.mxu0 0
    %261 = vmatpush2.bf16.msra.mxu0 0
    %262 = vmatprep.subr.bf16.mxu0 0
    %263 = vmatpush2.bf16.msra.mxu0 0
    %264 = vmatprep.subr.bf16.mxu0 0
    %265 = vmatpush2.bf16.msra.mxu0 0
    %266 = vmatprep.subr.bf16.mxu0 0
    %267 = vmatpush2.bf16.msra.mxu0 0
    %268 = vmatprep.subr.bf16.mxu0 0
    %269 = vmatpush2.bf16.msra.mxu0 0
    %270 = vmatprep.subr.bf16.mxu0 0
    %271 = vmatpush2.bf16.msra.mxu0 0
    %272 = vmatprep.mubr.bf16.mxu0 0
    %273 = vmatmul.mubr.bf16.gmra.mxu0 %v238
    %v274 = vpop.f32.mrf.mxu0
    %v275 = vadd.f32 0.0, %v274
    %v276 = vpop.f32.mrf.mxu0
    %v277 = vpop.f32.mrf.mxu0
    %v278 = vadd.f32 0.0, %v277
    %v279 = vpop.f32.mrf.mxu0
    %280 = vdwg.mxu0
    %v281 = vpack.c.bf16 %v278, %v275
    %v282 = vld [vmem:[%s7] sm:$0xf]
    %v283 = vld [vmem:[%s8] sm:$0x1]
    %v285 = vlaneseq
    %v286 = vshrl.u32 %v285, 7
    %v287 = vsub.s32 0, %v286
    %v288 = vrot.slane %v283, %v287
    %vm290 = vcmask 64512
    %v292 = vsel %vm290, %v281, 0
    %vm294 = vcmask 1043456
    %v296 = vsel %vm294, %v282, 0
    %298 = vmatprep.subr.bf16.mxu0 0
    %299 = vmatpush1.bf16.msra.mxu0 0
    %300 = vmatprep.subr.bf16.mxu0 0
    %301 = vmatpush1.bf16.msra.mxu0 0
    %302 = vmatprep.subr.bf16.mxu0 0
    %303 = vmatpush1.bf16.msra.mxu0 0
    %304 = vmatprep.subr.bf16.mxu0 0
    %305 = vmatpush1.bf16.msra.mxu0 0
    %306 = vmatprep.subr.bf16.mxu0 0
    %307 = vmatpush1.bf16.msra.mxu0 0
    %308 = vmatprep.subr.bf16.mxu0 0
    %309 = vmatpush1.bf16.msra.mxu0 0
    %310 = vmatprep.subr.bf16.mxu0 0
    %311 = vmatpush1.bf16.msra.mxu0 0
    %312 = vmatprep.subr.bf16.mxu0 0
    %313 = vmatpush1.bf16.msra.mxu0 %v296
    %314 = vmatprep.subr.bf16.mxu0 0
    %315 = vmatpush2.bf16.msra.mxu0 0
    %316 = vmatprep.subr.bf16.mxu0 0
    %317 = vmatpush2.bf16.msra.mxu0 0
    %318 = vmatprep.subr.bf16.mxu0 0
    %319 = vmatpush2.bf16.msra.mxu0 0
    %320 = vmatprep.subr.bf16.mxu0 0
    %321 = vmatpush2.bf16.msra.mxu0 0
    %322 = vmatprep.subr.bf16.mxu0 0
    %323 = vmatpush2.bf16.msra.mxu0 0
    %324 = vmatprep.subr.bf16.mxu0 0
    %325 = vmatpush2.bf16.msra.mxu0 0
    %326 = vmatprep.subr.bf16.mxu0 0
    %327 = vmatpush2.bf16.msra.mxu0 0
    %328 = vmatprep.subr.bf16.mxu0 0
    %329 = vmatpush2.bf16.msra.mxu0 0
    %330 = vmatprep.mubr.bf16.mxu0 0
    %331 = vmatmul.mubr.bf16.gmra.mxu0 %v292
    %v332 = vpop.f32.mrf.mxu0
    %v333 = vadd.f32 %v288, %v332
    %v334 = vpop.f32.mrf.mxu0
    %v335 = vpop.f32.mrf.mxu0
    %v336 = vadd.f32 %v288, %v335
    %v337 = vpop.f32.mrf.mxu0
    %338 = vdwg.mxu0
    %vm339 = vcmp.gt.f32.partialorder %v333, 20.0
    %vm340 = vcmp.gt.f32.partialorder %v336, 20.0
    %v341 = vmin.f32 %v333, 20.0
    %v342 = vmin.f32 %v336, 20.0
    %v343 = vmul.f32 %v341, 1.442695
    %v344 = vpow.pop %v343
    %v345 = vmul.f32 %v342, 1.442695
    %v346 = vpow.pop %v345
    %v347 = vadd.f32 %v344, 1.0
    %v348 = vlog2.pop %v347
    %v349 = vmul.f32 %v348, 0.6931472
    %v350 = vmul.f32 -0.5, %v344
    %v351 = vadd.f32 %v350, 1.0
    %v352 = vmul.f32 %v351, %v344
    %v353 = vand.u32 2147483647, %v344
    %vm354 = vcmp.lt.f32.partialorder %v353, 0.0004427343
    %v355 = vsel %vm354, %v352, %v349
    %v356 = vadd.f32 %v346, 1.0
    %v357 = vlog2.pop %v356
    %v358 = vmul.f32 %v357, 0.6931472
    %v359 = vmul.f32 -0.5, %v346
    %v360 = vadd.f32 %v359, 1.0
    %v361 = vmul.f32 %v360, %v346
    %v362 = vand.u32 2147483647, %v346
    %vm363 = vcmp.lt.f32.partialorder %v362, 0.0004427343
    %v364 = vsel %vm363, %v361, %v358
    %v365 = vsel %vm339, %v333, %v355
    %v366 = vsel %vm340, %v336, %v364
    %v367 = vld [vmem:[%s9] sm:$0xff]
    %v368 = vld [vmem:[%s9 + $0x8] sm:$0xff]
    %v369 = vmul.f32 %v367, 1.442695
    %v370 = vpow.pop %v369
    %v371 = vmul.f32 %v368, 1.442695
    %v372 = vpow.pop %v371
    %v373 = vsub.f32 0.0, %v370
    %v374 = vsub.f32 0.0, %v372
    %v377 = vcombine.high %v365, %v365
    %v379 = vunpack.c.l.s4 1966171168
    %v380 = vunpack.c.0.s8 %v379
    %v381 = vlaneseq
    %v382 = vshrl.u32 %v381, 7
    %v383 = vsub.s32 %v380, %v382
    %v384 = vrot.slane %v365, %v383
    %v386 = vunpack.c.l.s4 1966171168
    %v387 = vunpack.c.0.s8 %v386
    %v388 = vlaneseq
    %v389 = vshrl.u32 %v388, 7
    %v390 = vsub.s32 %v387, %v389
    %v391 = vrot.slane %v377, %v390
    %v392 = vcombine.high %v384, %v384
    %v393 = vcombine.high %v391, %v391
    %v395 = vunpack.c.l.s4 1966171168
    %v396 = vunpack.c.0.s8 %v395
    %v397 = vlaneseq
    %v398 = vshrl.u32 %v397, 7
    %v399 = vsub.s32 %v396, %v398
    %v400 = vrot.slane %v384, %v399
    %v402 = vunpack.c.l.s4 1966171168
    %v403 = vunpack.c.0.s8 %v402
    %v404 = vlaneseq
    %v405 = vshrl.u32 %v404, 7
    %v406 = vsub.s32 %v403, %v405
    %v407 = vrot.slane %v391, %v406
    %v409 = vunpack.c.l.s4 1966171168
    %v410 = vunpack.c.0.s8 %v409
    %v411 = vlaneseq
    %v412 = vshrl.u32 %v411, 7
    %v413 = vsub.s32 %v410, %v412
    %v414 = vrot.slane %v392, %v413
    %v416 = vunpack.c.l.s4 1966171168
    %v417 = vunpack.c.0.s8 %v416
    %v418 = vlaneseq
    %v419 = vshrl.u32 %v418, 7
    %v420 = vsub.s32 %v417, %v419
    %v421 = vrot.slane %v393, %v420
    %v422 = vcombine.high %v400, %v400
    %v423 = vcombine.high %v407, %v407
    %v424 = vcombine.high %v414, %v414
    %v425 = vcombine.high %v421, %v421
    %v426 = vcombine.high %v366, %v366
    %v428 = vunpack.c.l.s4 1966171168
    %v429 = vunpack.c.0.s8 %v428
    %v430 = vlaneseq
    %v431 = vshrl.u32 %v430, 7
    %v432 = vsub.s32 %v429, %v431
    %v433 = vrot.slane %v366, %v432
    %v435 = vunpack.c.l.s4 1966171168
    %v436 = vunpack.c.0.s8 %v435
    %v437 = vlaneseq
    %v438 = vshrl.u32 %v437, 7
    %v439 = vsub.s32 %v436, %v438
    %v440 = vrot.slane %v426, %v439
    %v441 = vcombine.high %v433, %v433
    %v442 = vcombine.high %v440, %v440
    %v444 = vunpack.c.l.s4 1966171168
    %v445 = vunpack.c.0.s8 %v444
    %v446 = vlaneseq
    %v447 = vshrl.u32 %v446, 7
    %v448 = vsub.s32 %v445, %v447
    %v449 = vrot.slane %v433, %v448
    %v451 = vunpack.c.l.s4 1966171168
    %v452 = vunpack.c.0.s8 %v451
    %v453 = vlaneseq
    %v454 = vshrl.u32 %v453, 7
    %v455 = vsub.s32 %v452, %v454
    %v456 = vrot.slane %v440, %v455
    %v458 = vunpack.c.l.s4 1966171168
    %v459 = vunpack.c.0.s8 %v458
    %v460 = vlaneseq
    %v461 = vshrl.u32 %v460, 7
    %v462 = vsub.s32 %v459, %v461
    %v463 = vrot.slane %v441, %v462
    %v465 = vunpack.c.l.s4 1966171168
    %v466 = vunpack.c.0.s8 %v465
    %v467 = vlaneseq
    %v468 = vshrl.u32 %v467, 7
    %v469 = vsub.s32 %v466, %v468
    %v470 = vrot.slane %v442, %v469
    %v471 = vcombine.high %v449, %v449
    %v472 = vcombine.high %v456, %v456
    %v473 = vcombine.high %v463, %v463
    %v474 = vcombine.high %v470, %v470
    %v475 = vlaneseq
    %v476 = vshrl.u32 %v475, 7
    %v477 = vsub.s32 0, %v476
    %v478 = vrot.slane %v400, %v477
    %v479 = vlaneseq
    %v480 = vshrl.u32 %v479, 7
    %v481 = vsub.s32 0, %v480
    %v482 = vrot.slane %v414, %v481
    %v483 = vlaneseq
    %v484 = vshrl.u32 %v483, 7
    %v485 = vsub.s32 0, %v484
    %v486 = vrot.slane %v422, %v485
    %v487 = vlaneseq
    %v488 = vshrl.u32 %v487, 7
    %v489 = vsub.s32 0, %v488
    %v490 = vrot.slane %v424, %v489
    %v491 = vlaneseq
    %v492 = vshrl.u32 %v491, 7
    %v493 = vsub.s32 0, %v492
    %v494 = vrot.slane %v407, %v493
    %v495 = vlaneseq
    %v496 = vshrl.u32 %v495, 7
    %v497 = vsub.s32 0, %v496
    %v498 = vrot.slane %v421, %v497
    %v499 = vlaneseq
    %v500 = vshrl.u32 %v499, 7
    %v501 = vsub.s32 0, %v500
    %v502 = vrot.slane %v423, %v501
    %v503 = vlaneseq
    %v504 = vshrl.u32 %v503, 7
    %v505 = vsub.s32 0, %v504
    %v506 = vrot.slane %v425, %v505
    %v507 = vlaneseq
    %v508 = vshrl.u32 %v507, 7
    %v509 = vsub.s32 0, %v508
    %v510 = vrot.slane %v449, %v509
    %v511 = vlaneseq
    %v512 = vshrl.u32 %v511, 7
    %v513 = vsub.s32 0, %v512
    %v514 = vrot.slane %v463, %v513
    %v515 = vlaneseq
    %v516 = vshrl.u32 %v515, 7
    %v517 = vsub.s32 0, %v516
    %v518 = vrot.slane %v471, %v517
    %v519 = vlaneseq
    %v520 = vshrl.u32 %v519, 7
    %v521 = vsub.s32 0, %v520
    %v522 = vrot.slane %v473, %v521
    %v523 = vlaneseq
    %v524 = vshrl.u32 %v523, 7
    %v525 = vsub.s32 0, %v524
    %v526 = vrot.slane %v456, %v525
    %v527 = vlaneseq
    %v528 = vshrl.u32 %v527, 7
    %v529 = vsub.s32 0, %v528
    %v530 = vrot.slane %v470, %v529
    %v531 = vlaneseq
    %v532 = vshrl.u32 %v531, 7
    %v533 = vsub.s32 0, %v532
    %v534 = vrot.slane %v472, %v533
    %v535 = vlaneseq
    %v536 = vshrl.u32 %v535, 7
    %v537 = vsub.s32 0, %v536
    %v538 = vrot.slane %v474, %v537
    %v555 = vmul.f32 %v478, %v373
    %v556 = vmul.f32 %v478, %v374
    %v557 = vmul.f32 %v482, %v373
    %v558 = vmul.f32 %v482, %v374
    %v559 = vmul.f32 %v486, %v373
    %v560 = vmul.f32 %v486, %v374
    %v561 = vmul.f32 %v490, %v373
    %v562 = vmul.f32 %v490, %v374
    %v563 = vmul.f32 %v494, %v373
    %v564 = vmul.f32 %v494, %v374
    %v565 = vmul.f32 %v498, %v373
    %v566 = vmul.f32 %v498, %v374
    %v567 = vmul.f32 %v502, %v373
    %v568 = vmul.f32 %v502, %v374
    %v569 = vmul.f32 %v506, %v373
    %v570 = vmul.f32 %v506, %v374
    %v571 = vmul.f32 %v510, %v373
    %v572 = vmul.f32 %v510, %v374
    %v573 = vmul.f32 %v514, %v373
    %v574 = vmul.f32 %v514, %v374
    %v575 = vmul.f32 %v518, %v373
    %v576 = vmul.f32 %v518, %v374
    %v577 = vmul.f32 %v522, %v373
    %v578 = vmul.f32 %v522, %v374
    %v579 = vmul.f32 %v526, %v373
    %v580 = vmul.f32 %v526, %v374
    %v581 = vmul.f32 %v530, %v373
    %v582 = vmul.f32 %v530, %v374
    %v583 = vmul.f32 %v534, %v373
    %v584 = vmul.f32 %v534, %v374
    %v585 = vmul.f32 %v538, %v373
    %v586 = vmul.f32 %v538, %v374
    %v587 = vmul.f32 %v555, 1.442695
    %v588 = vpow.pop %v587
    %v589 = vmul.f32 %v556, 1.442695
    %v590 = vpow.pop %v589
    %v591 = vmul.f32 %v557, 1.442695
    %v592 = vpow.pop %v591
    %v593 = vmul.f32 %v558, 1.442695
    %v594 = vpow.pop %v593
    %v595 = vmul.f32 %v559, 1.442695
    %v596 = vpow.pop %v595
    %v597 = vmul.f32 %v560, 1.442695
    %v598 = vpow.pop %v597
    %v599 = vmul.f32 %v561, 1.442695
    %v600 = vpow.pop %v599
    %v601 = vmul.f32 %v562, 1.442695
    %v602 = vpow.pop %v601
    %v603 = vmul.f32 %v563, 1.442695
    %v604 = vpow.pop %v603
    %v605 = vmul.f32 %v564, 1.442695
    %v606 = vpow.pop %v605
    %v607 = vmul.f32 %v565, 1.442695
    %v608 = vpow.pop %v607
    %v609 = vmul.f32 %v566, 1.442695
    %v610 = vpow.pop %v609
    %v611 = vmul.f32 %v567, 1.442695
    %v612 = vpow.pop %v611
    %v613 = vmul.f32 %v568, 1.442695
    %v614 = vpow.pop %v613
    %v615 = vmul.f32 %v569, 1.442695
    %v616 = vpow.pop %v615
    %v617 = vmul.f32 %v570, 1.442695
    %v618 = vpow.pop %v617
    %v619 = vmul.f32 %v571, 1.442695
    %v620 = vpow.pop %v619
    %v621 = vmul.f32 %v572, 1.442695
    %v622 = vpow.pop %v621
    %v623 = vmul.f32 %v573, 1.442695
    %v624 = vpow.pop %v623
    %v625 = vmul.f32 %v574, 1.442695
    %v626 = vpow.pop %v625
    %v627 = vmul.f32 %v575, 1.442695
    %v628 = vpow.pop %v627
    %v629 = vmul.f32 %v576, 1.442695
    %v630 = vpow.pop %v629
    %v631 = vmul.f32 %v577, 1.442695
    %v632 = vpow.pop %v631
    %v633 = vmul.f32 %v578, 1.442695
    %v634 = vpow.pop %v633
    %v635 = vmul.f32 %v579, 1.442695
    %v636 = vpow.pop %v635
    %v637 = vmul.f32 %v580, 1.442695
    %v638 = vpow.pop %v637
    %v639 = vmul.f32 %v581, 1.442695
    %v640 = vpow.pop %v639
    %v641 = vmul.f32 %v582, 1.442695
    %v642 = vpow.pop %v641
    %v643 = vmul.f32 %v583, 1.442695
    %v644 = vpow.pop %v643
    %v645 = vmul.f32 %v584, 1.442695
    %v646 = vpow.pop %v645
    %v647 = vmul.f32 %v585, 1.442695
    %v648 = vpow.pop %v647
    %v649 = vmul.f32 %v586, 1.442695
    %v650 = vpow.pop %v649
    %651 = vst.msk [vmem:[#allocation2] sm:$0xff] %vm236, %v588
    %652 = vst.msk [vmem:[#allocation2 + $0x8] sm:$0xff] %vm236, %v590
    %653 = vst.msk [vmem:[#allocation2 + $0x10] sm:$0xff] %vm236, %v592
    %654 = vst.msk [vmem:[#allocation2 + $0x18] sm:$0xff] %vm236, %v594
    %655 = vst.msk [vmem:[#allocation2 + $0x20] sm:$0xff] %vm236, %v596
    %656 = vst.msk [vmem:[#allocation2 + $0x28] sm:$0xff] %vm236, %v598
    %657 = vst.msk [vmem:[#allocation2 + $0x30] sm:$0xff] %vm236, %v600
    %658 = vst.msk [vmem:[#allocation2 + $0x38] sm:$0xff] %vm236, %v602
    %659 = vst.msk [vmem:[#allocation2 + $0x40] sm:$0xff] %vm236, %v604
    %660 = vst.msk [vmem:[#allocation2 + $0x48] sm:$0xff] %vm236, %v606
    %661 = vst.msk [vmem:[#allocation2 + $0x50] sm:$0xff] %vm236, %v608
    %662 = vst.msk [vmem:[#allocation2 + $0x58] sm:$0xff] %vm236, %v610
    %663 = vst.msk [vmem:[#allocation2 + $0x60] sm:$0xff] %vm236, %v612
    %664 = vst.msk [vmem:[#allocation2 + $0x68] sm:$0xff] %vm236, %v614
    %665 = vst.msk [vmem:[#allocation2 + $0x70] sm:$0xff] %vm236, %v616
    %666 = vst.msk [vmem:[#allocation2 + $0x78] sm:$0xff] %vm236, %v618
    %667 = vst.msk [vmem:[#allocation2 + $0x80] sm:$0xff] %vm236, %v620
    %668 = vst.msk [vmem:[#allocation2 + $0x88] sm:$0xff] %vm236, %v622
    %669 = vst.msk [vmem:[#allocation2 + $0x90] sm:$0xff] %vm236, %v624
    %670 = vst.msk [vmem:[#allocation2 + $0x98] sm:$0xff] %vm236, %v626
    %671 = vst.msk [vmem:[#allocation2 + $0xa0] sm:$0xff] %vm236, %v628
    %672 = vst.msk [vmem:[#allocation2 + $0xa8] sm:$0xff] %vm236, %v630
    %673 = vst.msk [vmem:[#allocation2 + $0xb0] sm:$0xff] %vm236, %v632
    %674 = vst.msk [vmem:[#allocation2 + $0xb8] sm:$0xff] %vm236, %v634
    %675 = vst.msk [vmem:[#allocation2 + $0xc0] sm:$0xff] %vm236, %v636
    %676 = vst.msk [vmem:[#allocation2 + $0xc8] sm:$0xff] %vm236, %v638
    %677 = vst.msk [vmem:[#allocation2 + $0xd0] sm:$0xff] %vm236, %v640
    %678 = vst.msk [vmem:[#allocation2 + $0xd8] sm:$0xff] %vm236, %v642
    %679 = vst.msk [vmem:[#allocation2 + $0xe0] sm:$0xff] %vm236, %v644
    %680 = vst.msk [vmem:[#allocation2 + $0xe8] sm:$0xff] %vm236, %v646
    %681 = vst.msk [vmem:[#allocation2 + $0xf0] sm:$0xff] %vm236, %v648
    %682 = vst.msk [vmem:[#allocation2 + $0xf8] sm:$0xff] %vm236, %v650
    %v683 = vmul.f32 %v365, %v201
    %v684 = vmul.f32 %v366, %v202
    %v687 = vcombine.high %v683, %v683
    %v689 = vunpack.c.l.s4 1966171168
    %v690 = vunpack.c.0.s8 %v689
    %v691 = vlaneseq
    %v692 = vshrl.u32 %v691, 7
    %v693 = vsub.s32 %v690, %v692
    %v694 = vrot.slane %v683, %v693
    %v696 = vunpack.c.l.s4 1966171168
    %v697 = vunpack.c.0.s8 %v696
    %v698 = vlaneseq
    %v699 = vshrl.u32 %v698, 7
    %v700 = vsub.s32 %v697, %v699
    %v701 = vrot.slane %v687, %v700
    %v702 = vcombine.high %v694, %v694
    %v703 = vcombine.high %v701, %v701
    %v705 = vunpack.c.l.s4 1966171168
    %v706 = vunpack.c.0.s8 %v705
    %v707 = vlaneseq
    %v708 = vshrl.u32 %v707, 7
    %v709 = vsub.s32 %v706, %v708
    %v710 = vrot.slane %v694, %v709
    %v712 = vunpack.c.l.s4 1966171168
    %v713 = vunpack.c.0.s8 %v712
    %v714 = vlaneseq
    %v715 = vshrl.u32 %v714, 7
    %v716 = vsub.s32 %v713, %v715
    %v717 = vrot.slane %v701, %v716
    %v719 = vunpack.c.l.s4 1966171168
    %v720 = vunpack.c.0.s8 %v719
    %v721 = vlaneseq
    %v722 = vshrl.u32 %v721, 7
    %v723 = vsub.s32 %v720, %v722
    %v724 = vrot.slane %v702, %v723
    %v726 = vunpack.c.l.s4 1966171168
    %v727 = vunpack.c.0.s8 %v726
    %v728 = vlaneseq
    %v729 = vshrl.u32 %v728, 7
    %v730 = vsub.s32 %v727, %v729
    %v731 = vrot.slane %v703, %v730
    %v732 = vcombine.high %v710, %v710
    %v733 = vcombine.high %v717, %v717
    %v734 = vcombine.high %v724, %v724
    %v735 = vcombine.high %v731, %v731
    %v736 = vcombine.high %v684, %v684
    %v738 = vunpack.c.l.s4 1966171168
    %v739 = vunpack.c.0.s8 %v738
    %v740 = vlaneseq
    %v741 = vshrl.u32 %v740, 7
    %v742 = vsub.s32 %v739, %v741
    %v743 = vrot.slane %v684, %v742
    %v745 = vunpack.c.l.s4 1966171168
    %v746 = vunpack.c.0.s8 %v745
    %v747 = vlaneseq
    %v748 = vshrl.u32 %v747, 7
    %v749 = vsub.s32 %v746, %v748
    %v750 = vrot.slane %v736, %v749
    %v751 = vcombine.high %v743, %v743
    %v752 = vcombine.high %v750, %v750
    %v754 = vunpack.c.l.s4 1966171168
    %v755 = vunpack.c.0.s8 %v754
    %v756 = vlaneseq
    %v757 = vshrl.u32 %v756, 7
    %v758 = vsub.s32 %v755, %v757
    %v759 = vrot.slane %v743, %v758
    %v761 = vunpack.c.l.s4 1966171168
    %v762 = vunpack.c.0.s8 %v761
    %v763 = vlaneseq
    %v764 = vshrl.u32 %v763, 7
    %v765 = vsub.s32 %v762, %v764
    %v766 = vrot.slane %v750, %v765
    %v768 = vunpack.c.l.s4 1966171168
    %v769 = vunpack.c.0.s8 %v768
    %v770 = vlaneseq
    %v771 = vshrl.u32 %v770, 7
    %v772 = vsub.s32 %v769, %v771
    %v773 = vrot.slane %v751, %v772
    %v775 = vunpack.c.l.s4 1966171168
    %v776 = vunpack.c.0.s8 %v775
    %v777 = vlaneseq
    %v778 = vshrl.u32 %v777, 7
    %v779 = vsub.s32 %v776, %v778
    %v780 = vrot.slane %v752, %v779
    %v781 = vcombine.high %v759, %v759
    %v782 = vcombine.high %v766, %v766
    %v783 = vcombine.high %v773, %v773
    %v784 = vcombine.high %v780, %v780
    %v785 = vlaneseq
    %v786 = vshrl.u32 %v785, 7
    %v787 = vsub.s32 0, %v786
    %v788 = vrot.slane %v275, %v787
    %s790 = sor.u32 256, 8
    %791 = vbcast.lane.b32.xlu0 %v788, %s790
    %v792 = vpop.permute.xlu0 %791
    %s794 = sor.u32 256, 16
    %795 = vbcast.lane.b32.xlu0 %v788, %s794
    %v796 = vpop.permute.xlu0 %795
    %v797 = vlaneseq
    %v798 = vshrl.u32 %v797, 7
    %v799 = vsub.s32 1, %v798
    %v800 = vrot.slane %v275, %v799
    %s802 = sor.u32 256, 8
    %803 = vbcast.lane.b32.xlu0 %v800, %s802
    %v804 = vpop.permute.xlu0 %803
    %s806 = sor.u32 256, 16
    %807 = vbcast.lane.b32.xlu0 %v800, %s806
    %v808 = vpop.permute.xlu0 %807
    %v809 = vlaneseq
    %v810 = vshrl.u32 %v809, 7
    %v811 = vsub.s32 2, %v810
    %v812 = vrot.slane %v275, %v811
    %s814 = sor.u32 256, 8
    %815 = vbcast.lane.b32.xlu0 %v812, %s814
    %v816 = vpop.permute.xlu0 %815
    %s818 = sor.u32 256, 16
    %819 = vbcast.lane.b32.xlu0 %v812, %s818
    %v820 = vpop.permute.xlu0 %819
    %v821 = vlaneseq
    %v822 = vshrl.u32 %v821, 7
    %v823 = vsub.s32 3, %v822
    %v824 = vrot.slane %v275, %v823
    %s826 = sor.u32 256, 8
    %827 = vbcast.lane.b32.xlu0 %v824, %s826
    %v828 = vpop.permute.xlu0 %827
    %s830 = sor.u32 256, 16
    %831 = vbcast.lane.b32.xlu0 %v824, %s830
    %v832 = vpop.permute.xlu0 %831
    %v833 = vlaneseq
    %v834 = vshrl.u32 %v833, 7
    %v835 = vsub.s32 4, %v834
    %v836 = vrot.slane %v275, %v835
    %s838 = sor.u32 256, 8
    %839 = vbcast.lane.b32.xlu0 %v836, %s838
    %v840 = vpop.permute.xlu0 %839
    %s842 = sor.u32 256, 16
    %843 = vbcast.lane.b32.xlu0 %v836, %s842
    %v844 = vpop.permute.xlu0 %843
    %v845 = vlaneseq
    %v846 = vshrl.u32 %v845, 7
    %v847 = vsub.s32 5, %v846
    %v848 = vrot.slane %v275, %v847
    %s850 = sor.u32 256, 8
    %851 = vbcast.lane.b32.xlu0 %v848, %s850
    %v852 = vpop.permute.xlu0 %851
    %s854 = sor.u32 256, 16
    %855 = vbcast.lane.b32.xlu0 %v848, %s854
    %v856 = vpop.permute.xlu0 %855
    %v857 = vlaneseq
    %v858 = vshrl.u32 %v857, 7
    %v859 = vsub.s32 6, %v858
    %v860 = vrot.slane %v275, %v859
    %s862 = sor.u32 256, 8
    %863 = vbcast.lane.b32.xlu0 %v860, %s862
    %v864 = vpop.permute.xlu0 %863
    %s866 = sor.u32 256, 16
    %867 = vbcast.lane.b32.xlu0 %v860, %s866
    %v868 = vpop.permute.xlu0 %867
    %v869 = vlaneseq
    %v870 = vshrl.u32 %v869, 7
    %v871 = vsub.s32 7, %v870
    %v872 = vrot.slane %v275, %v871
    %s874 = sor.u32 256, 8
    %875 = vbcast.lane.b32.xlu0 %v872, %s874
    %v876 = vpop.permute.xlu0 %875
    %s878 = sor.u32 256, 16
    %879 = vbcast.lane.b32.xlu0 %v872, %s878
    %v880 = vpop.permute.xlu0 %879
    %v881 = vlaneseq
    %v882 = vshrl.u32 %v881, 7
    %v883 = vsub.s32 0, %v882
    %v884 = vrot.slane %v278, %v883
    %s886 = sor.u32 256, 8
    %887 = vbcast.lane.b32.xlu0 %v884, %s886
    %v888 = vpop.permute.xlu0 %887
    %s890 = sor.u32 256, 16
    %891 = vbcast.lane.b32.xlu0 %v884, %s890
    %v892 = vpop.permute.xlu0 %891
    %v893 = vlaneseq
    %v894 = vshrl.u32 %v893, 7
    %v895 = vsub.s32 1, %v894
    %v896 = vrot.slane %v278, %v895
    %s898 = sor.u32 256, 8
    %899 = vbcast.lane.b32.xlu0 %v896, %s898
    %v900 = vpop.permute.xlu0 %899
    %s902 = sor.u32 256, 16
    %903 = vbcast.lane.b32.xlu0 %v896, %s902
    %v904 = vpop.permute.xlu0 %903
    %v905 = vlaneseq
    %v906 = vshrl.u32 %v905, 7
    %v907 = vsub.s32 2, %v906
    %v908 = vrot.slane %v278, %v907
    %s910 = sor.u32 256, 8
    %911 = vbcast.lane.b32.xlu0 %v908, %s910
    %v912 = vpop.permute.xlu0 %911
    %s914 = sor.u32 256, 16
    %915 = vbcast.lane.b32.xlu0 %v908, %s914
    %v916 = vpop.permute.xlu0 %915
    %v917 = vlaneseq
    %v918 = vshrl.u32 %v917, 7
    %v919 = vsub.s32 3, %v918
    %v920 = vrot.slane %v278, %v919
    %s922 = sor.u32 256, 8
    %923 = vbcast.lane.b32.xlu0 %v920, %s922
    %v924 = vpop.permute.xlu0 %923
    %s926 = sor.u32 256, 16
    %927 = vbcast.lane.b32.xlu0 %v920, %s926
    %v928 = vpop.permute.xlu0 %927
    %v929 = vlaneseq
    %v930 = vshrl.u32 %v929, 7
    %v931 = vsub.s32 4, %v930
    %v932 = vrot.slane %v278, %v931
    %s934 = sor.u32 256, 8
    %935 = vbcast.lane.b32.xlu0 %v932, %s934
    %v936 = vpop.permute.xlu0 %935
    %s938 = sor.u32 256, 16
    %939 = vbcast.lane.b32.xlu0 %v932, %s938
    %v940 = vpop.permute.xlu0 %939
    %v941 = vlaneseq
    %v942 = vshrl.u32 %v941, 7
    %v943 = vsub.s32 5, %v942
    %v944 = vrot.slane %v278, %v943
    %s946 = sor.u32 256, 8
    %947 = vbcast.lane.b32.xlu0 %v944, %s946
    %v948 = vpop.permute.xlu0 %947
    %s950 = sor.u32 256, 16
    %951 = vbcast.lane.b32.xlu0 %v944, %s950
    %v952 = vpop.permute.xlu0 %951
    %v953 = vlaneseq
    %v954 = vshrl.u32 %v953, 7
    %v955 = vsub.s32 6, %v954
    %v956 = vrot.slane %v278, %v955
    %s958 = sor.u32 256, 8
    %959 = vbcast.lane.b32.xlu0 %v956, %s958
    %v960 = vpop.permute.xlu0 %959
    %s962 = sor.u32 256, 16
    %963 = vbcast.lane.b32.xlu0 %v956, %s962
    %v964 = vpop.permute.xlu0 %963
    %v965 = vlaneseq
    %v966 = vshrl.u32 %v965, 7
    %v967 = vsub.s32 7, %v966
    %v968 = vrot.slane %v278, %v967
    %s970 = sor.u32 256, 8
    %971 = vbcast.lane.b32.xlu0 %v968, %s970
    %v972 = vpop.permute.xlu0 %971
    %s974 = sor.u32 256, 16
    %975 = vbcast.lane.b32.xlu0 %v968, %s974
    %v976 = vpop.permute.xlu0 %975
    %v977 = vlaneseq
    %v978 = vshrl.u32 %v977, 7
    %v979 = vsub.s32 0, %v978
    %v980 = vrot.slane %v710, %v979
    %v981 = vlaneseq
    %v982 = vshrl.u32 %v981, 7
    %v983 = vsub.s32 0, %v982
    %v984 = vrot.slane %v724, %v983
    %v985 = vlaneseq
    %v986 = vshrl.u32 %v985, 7
    %v987 = vsub.s32 0, %v986
    %v988 = vrot.slane %v732, %v987
    %v989 = vlaneseq
    %v990 = vshrl.u32 %v989, 7
    %v991 = vsub.s32 0, %v990
    %v992 = vrot.slane %v734, %v991
    %v993 = vlaneseq
    %v994 = vshrl.u32 %v993, 7
    %v995 = vsub.s32 0, %v994
    %v996 = vrot.slane %v717, %v995
    %v997 = vlaneseq
    %v998 = vshrl.u32 %v997, 7
    %v999 = vsub.s32 0, %v998
    %v1000 = vrot.slane %v731, %v999
    %v1001 = vlaneseq
    %v1002 = vshrl.u32 %v1001, 7
    %v1003 = vsub.s32 0, %v1002
    %v1004 = vrot.slane %v733, %v1003
    %v1005 = vlaneseq
    %v1006 = vshrl.u32 %v1005, 7
    %v1007 = vsub.s32 0, %v1006
    %v1008 = vrot.slane %v735, %v1007
    %v1009 = vlaneseq
    %v1010 = vshrl.u32 %v1009, 7
    %v1011 = vsub.s32 0, %v1010
    %v1012 = vrot.slane %v759, %v1011
    %v1013 = vlaneseq
    %v1014 = vshrl.u32 %v1013, 7
    %v1015 = vsub.s32 0, %v1014
    %v1016 = vrot.slane %v773, %v1015
    %v1017 = vlaneseq
    %v1018 = vshrl.u32 %v1017, 7
    %v1019 = vsub.s32 0, %v1018
    %v1020 = vrot.slane %v781, %v1019
    %v1021 = vlaneseq
    %v1022 = vshrl.u32 %v1021, 7
    %v1023 = vsub.s32 0, %v1022
    %v1024 = vrot.slane %v783, %v1023
    %v1025 = vlaneseq
    %v1026 = vshrl.u32 %v1025, 7
    %v1027 = vsub.s32 0, %v1026
    %v1028 = vrot.slane %v766, %v1027
    %v1029 = vlaneseq
    %v1030 = vshrl.u32 %v1029, 7
    %v1031 = vsub.s32 0, %v1030
    %v1032 = vrot.slane %v780, %v1031
    %v1033 = vlaneseq
    %v1034 = vshrl.u32 %v1033, 7
    %v1035 = vsub.s32 0, %v1034
    %v1036 = vrot.slane %v782, %v1035
    %v1037 = vlaneseq
    %v1038 = vshrl.u32 %v1037, 7
    %v1039 = vsub.s32 0, %v1038
    %v1040 = vrot.slane %v784, %v1039
    %v1057 = vmul.f32 %v980, %v792
    %v1058 = vmul.f32 %v980, %v796
    %v1059 = vmul.f32 %v984, %v804
    %v1060 = vmul.f32 %v984, %v808
    %v1061 = vmul.f32 %v988, %v816
    %v1062 = vmul.f32 %v988, %v820
    %v1063 = vmul.f32 %v992, %v828
    %v1064 = vmul.f32 %v992, %v832
    %v1065 = vmul.f32 %v996, %v840
    %v1066 = vmul.f32 %v996, %v844
    %v1067 = vmul.f32 %v1000, %v852
    %v1068 = vmul.f32 %v1000, %v856
    %v1069 = vmul.f32 %v1004, %v864
    %v1070 = vmul.f32 %v1004, %v868
    %v1071 = vmul.f32 %v1008, %v876
    %v1072 = vmul.f32 %v1008, %v880
    %v1073 = vmul.f32 %v1012, %v888
    %v1074 = vmul.f32 %v1012, %v892
    %v1075 = vmul.f32 %v1016, %v900
    %v1076 = vmul.f32 %v1016, %v904
    %v1077 = vmul.f32 %v1020, %v912
    %v1078 = vmul.f32 %v1020, %v916
    %v1079 = vmul.f32 %v1024, %v924
    %v1080 = vmul.f32 %v1024, %v928
    %v1081 = vmul.f32 %v1028, %v936
    %v1082 = vmul.f32 %v1028, %v940
    %v1083 = vmul.f32 %v1032, %v948
    %v1084 = vmul.f32 %v1032, %v952
    %v1085 = vmul.f32 %v1036, %v960
    %v1086 = vmul.f32 %v1036, %v964
    %v1087 = vmul.f32 %v1040, %v972
    %v1088 = vmul.f32 %v1040, %v976
    %1089 = vst.msk [vmem:[#allocation3] sm:$0xff] %vm236, %v1057
    %1090 = vst.msk [vmem:[#allocation3 + $0x8] sm:$0xff] %vm236, %v1058
    %1091 = vst.msk [vmem:[#allocation3 + $0x10] sm:$0xff] %vm236, %v1059
    %1092 = vst.msk [vmem:[#allocation3 + $0x18] sm:$0xff] %vm236, %v1060
    %1093 = vst.msk [vmem:[#allocation3 + $0x20] sm:$0xff] %vm236, %v1061
    %1094 = vst.msk [vmem:[#allocation3 + $0x28] sm:$0xff] %vm236, %v1062
    %1095 = vst.msk [vmem:[#allocation3 + $0x30] sm:$0xff] %vm236, %v1063
    %1096 = vst.msk [vmem:[#allocation3 + $0x38] sm:$0xff] %vm236, %v1064
    %1097 = vst.msk [vmem:[#allocation3 + $0x40] sm:$0xff] %vm236, %v1065
    %1098 = vst.msk [vmem:[#allocation3 + $0x48] sm:$0xff] %vm236, %v1066
    %1099 = vst.msk [vmem:[#allocation3 + $0x50] sm:$0xff] %vm236, %v1067
    %1100 = vst.msk [vmem:[#allocation3 + $0x58] sm:$0xff] %vm236, %v1068
    %1101 = vst.msk [vmem:[#allocation3 + $0x60] sm:$0xff] %vm236, %v1069
    %1102 = vst.msk [vmem:[#allocation3 + $0x68] sm:$0xff] %vm236, %v1070
    %1103 = vst.msk [vmem:[#allocation3 + $0x70] sm:$0xff] %vm236, %v1071
    %1104 = vst.msk [vmem:[#allocation3 + $0x78] sm:$0xff] %vm236, %v1072
    %1105 = vst.msk [vmem:[#allocation3 + $0x80] sm:$0xff] %vm236, %v1073
    %1106 = vst.msk [vmem:[#allocation3 + $0x88] sm:$0xff] %vm236, %v1074
    %1107 = vst.msk [vmem:[#allocation3 + $0x90] sm:$0xff] %vm236, %v1075
    %1108 = vst.msk [vmem:[#allocation3 + $0x98] sm:$0xff] %vm236, %v1076
    %1109 = vst.msk [vmem:[#allocation3 + $0xa0] sm:$0xff] %vm236, %v1077
    %1110 = vst.msk [vmem:[#allocation3 + $0xa8] sm:$0xff] %vm236, %v1078
    %1111 = vst.msk [vmem:[#allocation3 + $0xb0] sm:$0xff] %vm236, %v1079
    %1112 = vst.msk [vmem:[#allocation3 + $0xb8] sm:$0xff] %vm236, %v1080
    %1113 = vst.msk [vmem:[#allocation3 + $0xc0] sm:$0xff] %vm236, %v1081
    %1114 = vst.msk [vmem:[#allocation3 + $0xc8] sm:$0xff] %vm236, %v1082
    %1115 = vst.msk [vmem:[#allocation3 + $0xd0] sm:$0xff] %vm236, %v1083
    %1116 = vst.msk [vmem:[#allocation3 + $0xd8] sm:$0xff] %vm236, %v1084
    %1117 = vst.msk [vmem:[#allocation3 + $0xe0] sm:$0xff] %vm236, %v1085
    %1118 = vst.msk [vmem:[#allocation3 + $0xe8] sm:$0xff] %vm236, %v1086
    %1119 = vst.msk [vmem:[#allocation3 + $0xf0] sm:$0xff] %vm236, %v1087
    %1120 = vst.msk [vmem:[#allocation3 + $0xf8] sm:$0xff] %vm236, %v1088
    %v1121 = vld [vmem:[#allocation2] sm:$0xff]
    %v1122 = vld [vmem:[#allocation2 + $0x8] sm:$0xff]
    %v1123 = vmul.f32 %v1121, 0.0
    %v1124 = vmul.f32 %v1122, 0.0
    %v1125 = vld [vmem:[#allocation3] sm:$0xff]
    %v1126 = vld [vmem:[#allocation3 + $0x8] sm:$0xff]
    %v1127 = vadd.f32 %v1123, %v1125
    %v1128 = vadd.f32 %v1124, %v1126
    %1129 = vst.msk [vmem:[#allocation4] sm:$0xff] %vm236, %v1127
    %1130 = vst.msk [vmem:[#allocation4 + $0x8] sm:$0xff] %vm236, %v1128
    %s1131 = scalar_lea.vmem [#allocation2], 128
    %v1132 = vld [vmem:[%s1131] sm:$0xff]
    %v1133 = vld [vmem:[%s1131 + $0x8] sm:$0xff]
    %v1134 = vmul.f32 %v1132, 0.0
    %v1135 = vmul.f32 %v1133, 0.0
    %s1136 = scalar_lea.vmem [#allocation3], 128
    %v1137 = vld [vmem:[%s1136] sm:$0xff]
    %v1138 = vld [vmem:[%s1136 + $0x8] sm:$0xff]
    %v1139 = vadd.f32 %v1134, %v1137
    %v1140 = vadd.f32 %v1135, %v1138
    %s1141 = scalar_lea.vmem [#allocation4], 128
    %1142 = vst.msk [vmem:[%s1141] sm:$0xff] %vm236, %v1139
    %1143 = vst.msk [vmem:[%s1141 + $0x8] sm:$0xff] %vm236, %v1140
    %s1144 = scalar_lea.vmem [#allocation2], 16
    %v1145 = vld [vmem:[%s1144] sm:$0xff]
    %v1146 = vld [vmem:[%s1144 + $0x8] sm:$0xff]
    %v1147 = vmul.f32 %v1145, %v1127
    %v1148 = vmul.f32 %v1146, %v1128
    %s1149 = scalar_lea.vmem [#allocation3], 16
    %v1150 = vld [vmem:[%s1149] sm:$0xff]
    %v1151 = vld [vmem:[%s1149 + $0x8] sm:$0xff]
    %v1152 = vadd.f32 %v1147, %v1150
    %v1153 = vadd.f32 %v1148, %v1151
    %s1154 = scalar_lea.vmem [#allocation4], 16
    %1155 = vst.msk [vmem:[%s1154] sm:$0xff] %vm236, %v1152
    %1156 = vst.msk [vmem:[%s1154 + $0x8] sm:$0xff] %vm236, %v1153
    %s1157 = scalar_lea.vmem [#allocation2], 144
    %v1158 = vld [vmem:[%s1157] sm:$0xff]
    %v1159 = vld [vmem:[%s1157 + $0x8] sm:$0xff]
    %v1160 = vmul.f32 %v1158, %v1139
    %v1161 = vmul.f32 %v1159, %v1140
    %s1162 = scalar_lea.vmem [#allocation3], 144
    %v1163 = vld [vmem:[%s1162] sm:$0xff]
    %v1164 = vld [vmem:[%s1162 + $0x8] sm:$0xff]
    %v1165 = vadd.f32 %v1160, %v1163
    %v1166 = vadd.f32 %v1161, %v1164
    %s1167 = scalar_lea.vmem [#allocation4], 144
    %1168 = vst.msk [vmem:[%s1167] sm:$0xff] %vm236, %v1165
    %1169 = vst.msk [vmem:[%s1167 + $0x8] sm:$0xff] %vm236, %v1166
    %s1170 = scalar_lea.vmem [#allocation2], 32
    %v1171 = vld [vmem:[%s1170] sm:$0xff]
    %v1172 = vld [vmem:[%s1170 + $0x8] sm:$0xff]
    %v1173 = vmul.f32 %v1171, %v1152
    %v1174 = vmul.f32 %v1172, %v1153
    %s1175 = scalar_lea.vmem [#allocation3], 32
    %v1176 = vld [vmem:[%s1175] sm:$0xff]
    %v1177 = vld [vmem:[%s1175 + $0x8] sm:$0xff]
    %v1178 = vadd.f32 %v1173, %v1176
    %v1179 = vadd.f32 %v1174, %v1177
    %s1180 = scalar_lea.vmem [#allocation4], 32
    %1181 = vst.msk [vmem:[%s1180] sm:$0xff] %vm236, %v1178
    %1182 = vst.msk [vmem:[%s1180 + $0x8] sm:$0xff] %vm236, %v1179
    %s1183 = scalar_lea.vmem [#allocation2], 160
    %v1184 = vld [vmem:[%s1183] sm:$0xff]
    %v1185 = vld [vmem:[%s1183 + $0x8] sm:$0xff]
    %v1186 = vmul.f32 %v1184, %v1165
    %v1187 = vmul.f32 %v1185, %v1166
    %s1188 = scalar_lea.vmem [#allocation3], 160
    %v1189 = vld [vmem:[%s1188] sm:$0xff]
    %v1190 = vld [vmem:[%s1188 + $0x8] sm:$0xff]
    %v1191 = vadd.f32 %v1186, %v1189
    %v1192 = vadd.f32 %v1187, %v1190
    %s1193 = scalar_lea.vmem [#allocation4], 160
    %1194 = vst.msk [vmem:[%s1193] sm:$0xff] %vm236, %v1191
    %1195 = vst.msk [vmem:[%s1193 + $0x8] sm:$0xff] %vm236, %v1192
    %s1196 = scalar_lea.vmem [#allocation2], 48
    %v1197 = vld [vmem:[%s1196] sm:$0xff]
    %v1198 = vld [vmem:[%s1196 + $0x8] sm:$0xff]
    %v1199 = vmul.f32 %v1197, %v1178
    %v1200 = vmul.f32 %v1198, %v1179
    %s1201 = scalar_lea.vmem [#allocation3], 48
    %v1202 = vld [vmem:[%s1201] sm:$0xff]
    %v1203 = vld [vmem:[%s1201 + $0x8] sm:$0xff]
    %v1204 = vadd.f32 %v1199, %v1202
    %v1205 = vadd.f32 %v1200, %v1203
    %s1206 = scalar_lea.vmem [#allocation4], 48
    %1207 = vst.msk [vmem:[%s1206] sm:$0xff] %vm236, %v1204
    %1208 = vst.msk [vmem:[%s1206 + $0x8] sm:$0xff] %vm236, %v1205
    %s1209 = scalar_lea.vmem [#allocation2], 176
    %v1210 = vld [vmem:[%s1209] sm:$0xff]
    %v1211 = vld [vmem:[%s1209 + $0x8] sm:$0xff]
    %v1212 = vmul.f32 %v1210, %v1191
    %v1213 = vmul.f32 %v1211, %v1192
    %s1214 = scalar_lea.vmem [#allocation3], 176
    %v1215 = vld [vmem:[%s1214] sm:$0xff]
    %v1216 = vld [vmem:[%s1214 + $0x8] sm:$0xff]
    %v1217 = vadd.f32 %v1212, %v1215
    %v1218 = vadd.f32 %v1213, %v1216
    %s1219 = scalar_lea.vmem [#allocation4], 176
    %1220 = vst.msk [vmem:[%s1219] sm:$0xff] %vm236, %v1217
    %1221 = vst.msk [vmem:[%s1219 + $0x8] sm:$0xff] %vm236, %v1218
    %s1222 = scalar_lea.vmem [#allocation2], 64
    %v1223 = vld [vmem:[%s1222] sm:$0xff]
    %v1224 = vld [vmem:[%s1222 + $0x8] sm:$0xff]
    %v1225 = vmul.f32 %v1223, %v1204
    %v1226 = vmul.f32 %v1224, %v1205
    %s1227 = scalar_lea.vmem [#allocation3], 64
    %v1228 = vld [vmem:[%s1227] sm:$0xff]
    %v1229 = vld [vmem:[%s1227 + $0x8] sm:$0xff]
    %v1230 = vadd.f32 %v1225, %v1228
    %v1231 = vadd.f32 %v1226, %v1229
    %s1232 = scalar_lea.vmem [#allocation4], 64
    %1233 = vst.msk [vmem:[%s1232] sm:$0xff] %vm236, %v1230
    %1234 = vst.msk [vmem:[%s1232 + $0x8] sm:$0xff] %vm236, %v1231
    %s1235 = scalar_lea.vmem [#allocation2], 192
    %v1236 = vld [vmem:[%s1235] sm:$0xff]
    %v1237 = vld [vmem:[%s1235 + $0x8] sm:$0xff]
    %v1238 = vmul.f32 %v1236, %v1217
    %v1239 = vmul.f32 %v1237, %v1218
    %s1240 = scalar_lea.vmem [#allocation3], 192
    %v1241 = vld [vmem:[%s1240] sm:$0xff]
    %v1242 = vld [vmem:[%s1240 + $0x8] sm:$0xff]
    %v1243 = vadd.f32 %v1238, %v1241
    %v1244 = vadd.f32 %v1239, %v1242
    %s1245 = scalar_lea.vmem [#allocation4], 192
    %1246 = vst.msk [vmem:[%s1245] sm:$0xff] %vm236, %v1243
    %1247 = vst.msk [vmem:[%s1245 + $0x8] sm:$0xff] %vm236, %v1244
    %s1248 = scalar_lea.vmem [#allocation2], 80
    %v1249 = vld [vmem:[%s1248] sm:$0xff]
    %v1250 = vld [vmem:[%s1248 + $0x8] sm:$0xff]
    %v1251 = vmul.f32 %v1249, %v1230
    %v1252 = vmul.f32 %v1250, %v1231
    %s1253 = scalar_lea.vmem [#allocation3], 80
    %v1254 = vld [vmem:[%s1253] sm:$0xff]
    %v1255 = vld [vmem:[%s1253 + $0x8] sm:$0xff]
    %v1256 = vadd.f32 %v1251, %v1254
    %v1257 = vadd.f32 %v1252, %v1255
    %s1258 = scalar_lea.vmem [#allocation4], 80
    %1259 = vst.msk [vmem:[%s1258] sm:$0xff] %vm236, %v1256
    %1260 = vst.msk [vmem:[%s1258 + $0x8] sm:$0xff] %vm236, %v1257
    %s1261 = scalar_lea.vmem [#allocation2], 208
    %v1262 = vld [vmem:[%s1261] sm:$0xff]
    %v1263 = vld [vmem:[%s1261 + $0x8] sm:$0xff]
    %v1264 = vmul.f32 %v1262, %v1243
    %v1265 = vmul.f32 %v1263, %v1244
    %s1266 = scalar_lea.vmem [#allocation3], 208
    %v1267 = vld [vmem:[%s1266] sm:$0xff]
    %v1268 = vld [vmem:[%s1266 + $0x8] sm:$0xff]
    %v1269 = vadd.f32 %v1264, %v1267
    %v1270 = vadd.f32 %v1265, %v1268
    %s1271 = scalar_lea.vmem [#allocation4], 208
    %1272 = vst.msk [vmem:[%s1271] sm:$0xff] %vm236, %v1269
    %1273 = vst.msk [vmem:[%s1271 + $0x8] sm:$0xff] %vm236, %v1270
    %s1274 = scalar_lea.vmem [#allocation2], 96
    %v1275 = vld [vmem:[%s1274] sm:$0xff]
    %v1276 = vld [vmem:[%s1274 + $0x8] sm:$0xff]
    %v1277 = vmul.f32 %v1275, %v1256
    %v1278 = vmul.f32 %v1276, %v1257
    %s1279 = scalar_lea.vmem [#allocation3], 96
    %v1280 = vld [vmem:[%s1279] sm:$0xff]
    %v1281 = vld [vmem:[%s1279 + $0x8] sm:$0xff]
    %v1282 = vadd.f32 %v1277, %v1280
    %v1283 = vadd.f32 %v1278, %v1281
    %s1284 = scalar_lea.vmem [#allocation4], 96
    %1285 = vst.msk [vmem:[%s1284] sm:$0xff] %vm236, %v1282
    %1286 = vst.msk [vmem:[%s1284 + $0x8] sm:$0xff] %vm236, %v1283
    %s1287 = scalar_lea.vmem [#allocation2], 224
    %v1288 = vld [vmem:[%s1287] sm:$0xff]
    %v1289 = vld [vmem:[%s1287 + $0x8] sm:$0xff]
    %v1290 = vmul.f32 %v1288, %v1269
    %v1291 = vmul.f32 %v1289, %v1270
    %s1292 = scalar_lea.vmem [#allocation3], 224
    %v1293 = vld [vmem:[%s1292] sm:$0xff]
    %v1294 = vld [vmem:[%s1292 + $0x8] sm:$0xff]
    %v1295 = vadd.f32 %v1290, %v1293
    %v1296 = vadd.f32 %v1291, %v1294
    %s1297 = scalar_lea.vmem [#allocation4], 224
    %1298 = vst.msk [vmem:[%s1297] sm:$0xff] %vm236, %v1295
    %1299 = vst.msk [vmem:[%s1297 + $0x8] sm:$0xff] %vm236, %v1296
    %s1300 = scalar_lea.vmem [#allocation2], 112
    %v1301 = vld [vmem:[%s1300] sm:$0xff]
    %v1302 = vld [vmem:[%s1300 + $0x8] sm:$0xff]
    %v1303 = vmul.f32 %v1301, %v1282
    %v1304 = vmul.f32 %v1302, %v1283
    %s1305 = scalar_lea.vmem [#allocation3], 112
    %v1306 = vld [vmem:[%s1305] sm:$0xff]
    %v1307 = vld [vmem:[%s1305 + $0x8] sm:$0xff]
    %v1308 = vadd.f32 %v1303, %v1306
    %v1309 = vadd.f32 %v1304, %v1307
    %s1310 = scalar_lea.vmem [#allocation4], 112
    %1311 = vst.msk [vmem:[%s1310] sm:$0xff] %vm236, %v1308
    %1312 = vst.msk [vmem:[%s1310 + $0x8] sm:$0xff] %vm236, %v1309
    %s1313 = scalar_lea.vmem [#allocation2], 240
    %v1314 = vld [vmem:[%s1313] sm:$0xff]
    %v1315 = vld [vmem:[%s1313 + $0x8] sm:$0xff]
    %v1316 = vmul.f32 %v1314, %v1295
    %v1317 = vmul.f32 %v1315, %v1296
    %s1318 = scalar_lea.vmem [#allocation3], 240
    %v1319 = vld [vmem:[%s1318] sm:$0xff]
    %v1320 = vld [vmem:[%s1318 + $0x8] sm:$0xff]
    %v1321 = vadd.f32 %v1316, %v1319
    %v1322 = vadd.f32 %v1317, %v1320
    %s1323 = scalar_lea.vmem [#allocation4], 240
    %1324 = vst.msk [vmem:[%s1323] sm:$0xff] %vm236, %v1321
    %1325 = vst.msk [vmem:[%s1323 + $0x8] sm:$0xff] %vm236, %v1322
    %v1326 = vld [vmem:[#allocation4] sm:$0xff]
    %v1327 = vld [vmem:[#allocation4 + $0x8] sm:$0xff]
    %v1328 = vld [vmem:[#allocation4 + $0x10] sm:$0xff]
    %v1329 = vld [vmem:[#allocation4 + $0x18] sm:$0xff]
    %v1330 = vld [vmem:[#allocation4 + $0x20] sm:$0xff]
    %v1331 = vld [vmem:[#allocation4 + $0x28] sm:$0xff]
    %v1332 = vld [vmem:[#allocation4 + $0x30] sm:$0xff]
    %v1333 = vld [vmem:[#allocation4 + $0x38] sm:$0xff]
    %v1334 = vld [vmem:[#allocation4 + $0x40] sm:$0xff]
    %v1335 = vld [vmem:[#allocation4 + $0x48] sm:$0xff]
    %v1336 = vld [vmem:[#allocation4 + $0x50] sm:$0xff]
    %v1337 = vld [vmem:[#allocation4 + $0x58] sm:$0xff]
    %v1338 = vld [vmem:[#allocation4 + $0x60] sm:$0xff]
    %v1339 = vld [vmem:[#allocation4 + $0x68] sm:$0xff]
    %v1340 = vld [vmem:[#allocation4 + $0x70] sm:$0xff]
    %v1341 = vld [vmem:[#allocation4 + $0x78] sm:$0xff]
    %v1342 = vld [vmem:[#allocation4 + $0x80] sm:$0xff]
    %v1343 = vld [vmem:[#allocation4 + $0x88] sm:$0xff]
    %v1344 = vld [vmem:[#allocation4 + $0x90] sm:$0xff]
    %v1345 = vld [vmem:[#allocation4 + $0x98] sm:$0xff]
    %v1346 = vld [vmem:[#allocation4 + $0xa0] sm:$0xff]
    %v1347 = vld [vmem:[#allocation4 + $0xa8] sm:$0xff]
    %v1348 = vld [vmem:[#allocation4 + $0xb0] sm:$0xff]
    %v1349 = vld [vmem:[#allocation4 + $0xb8] sm:$0xff]
    %v1350 = vld [vmem:[#allocation4 + $0xc0] sm:$0xff]
    %v1351 = vld [vmem:[#allocation4 + $0xc8] sm:$0xff]
    %v1352 = vld [vmem:[#allocation4 + $0xd0] sm:$0xff]
    %v1353 = vld [vmem:[#allocation4 + $0xd8] sm:$0xff]
    %v1354 = vld [vmem:[#allocation4 + $0xe0] sm:$0xff]
    %v1355 = vld [vmem:[#allocation4 + $0xe8] sm:$0xff]
    %v1356 = vld [vmem:[#allocation4 + $0xf0] sm:$0xff]
    %v1357 = vld [vmem:[#allocation4 + $0xf8] sm:$0xff]
    %s1359 = sor.u32 256, 24
    %1360 = vbcast.lane.b32.xlu0 %v788, %s1359
    %v1361 = vpop.permute.xlu0 %1360
    %s1363 = sor.u32 256, 32
    %1364 = vbcast.lane.b32.xlu0 %v788, %s1363
    %v1365 = vpop.permute.xlu0 %1364
    %s1367 = sor.u32 256, 24
    %1368 = vbcast.lane.b32.xlu0 %v800, %s1367
    %v1369 = vpop.permute.xlu0 %1368
    %s1371 = sor.u32 256, 32
    %1372 = vbcast.lane.b32.xlu0 %v800, %s1371
    %v1373 = vpop.permute.xlu0 %1372
    %s1375 = sor.u32 256, 24
    %1376 = vbcast.lane.b32.xlu0 %v812, %s1375
    %v1377 = vpop.permute.xlu0 %1376
    %s1379 = sor.u32 256, 32
    %1380 = vbcast.lane.b32.xlu0 %v812, %s1379
    %v1381 = vpop.permute.xlu0 %1380
    %s1383 = sor.u32 256, 24
    %1384 = vbcast.lane.b32.xlu0 %v824, %s1383
    %v1385 = vpop.permute.xlu0 %1384
    %s1387 = sor.u32 256, 32
    %1388 = vbcast.lane.b32.xlu0 %v824, %s1387
    %v1389 = vpop.permute.xlu0 %1388
    %s1391 = sor.u32 256, 24
    %1392 = vbcast.lane.b32.xlu0 %v836, %s1391
    %v1393 = vpop.permute.xlu0 %1392
    %s1395 = sor.u32 256, 32
    %1396 = vbcast.lane.b32.xlu0 %v836, %s1395
    %v1397 = vpop.permute.xlu0 %1396
    %s1399 = sor.u32 256, 24
    %1400 = vbcast.lane.b32.xlu0 %v848, %s1399
    %v1401 = vpop.permute.xlu0 %1400
    %s1403 = sor.u32 256, 32
    %1404 = vbcast.lane.b32.xlu0 %v848, %s1403
    %v1405 = vpop.permute.xlu0 %1404
    %s1407 = sor.u32 256, 24
    %1408 = vbcast.lane.b32.xlu0 %v860, %s1407
    %v1409 = vpop.permute.xlu0 %1408
    %s1411 = sor.u32 256, 32
    %1412 = vbcast.lane.b32.xlu0 %v860, %s1411
    %v1413 = vpop.permute.xlu0 %1412
    %s1415 = sor.u32 256, 24
    %1416 = vbcast.lane.b32.xlu0 %v872, %s1415
    %v1417 = vpop.permute.xlu0 %1416
    %s1419 = sor.u32 256, 32
    %1420 = vbcast.lane.b32.xlu0 %v872, %s1419
    %v1421 = vpop.permute.xlu0 %1420
    %s1423 = sor.u32 256, 24
    %1424 = vbcast.lane.b32.xlu0 %v884, %s1423
    %v1425 = vpop.permute.xlu0 %1424
    %s1427 = sor.u32 256, 32
    %1428 = vbcast.lane.b32.xlu0 %v884, %s1427
    %v1429 = vpop.permute.xlu0 %1428
    %s1431 = sor.u32 256, 24
    %1432 = vbcast.lane.b32.xlu0 %v896, %s1431
    %v1433 = vpop.permute.xlu0 %1432
    %s1435 = sor.u32 256, 32
    %1436 = vbcast.lane.b32.xlu0 %v896, %s1435
    %v1437 = vpop.permute.xlu0 %1436
    %s1439 = sor.u32 256, 24
    %1440 = vbcast.lane.b32.xlu0 %v908, %s1439
    %v1441 = vpop.permute.xlu0 %1440
    %s1443 = sor.u32 256, 32
    %1444 = vbcast.lane.b32.xlu0 %v908, %s1443
    %v1445 = vpop.permute.xlu0 %1444
    %s1447 = sor.u32 256, 24
    %1448 = vbcast.lane.b32.xlu0 %v920, %s1447
    %v1449 = vpop.permute.xlu0 %1448
    %s1451 = sor.u32 256, 32
    %1452 = vbcast.lane.b32.xlu0 %v920, %s1451
    %v1453 = vpop.permute.xlu0 %1452
    %s1455 = sor.u32 256, 24
    %1456 = vbcast.lane.b32.xlu0 %v932, %s1455
    %v1457 = vpop.permute.xlu0 %1456
    %s1459 = sor.u32 256, 32
    %1460 = vbcast.lane.b32.xlu0 %v932, %s1459
    %v1461 = vpop.permute.xlu0 %1460
    %s1463 = sor.u32 256, 24
    %1464 = vbcast.lane.b32.xlu0 %v944, %s1463
    %v1465 = vpop.permute.xlu0 %1464
    %s1467 = sor.u32 256, 32
    %1468 = vbcast.lane.b32.xlu0 %v944, %s1467
    %v1469 = vpop.permute.xlu0 %1468
    %s1471 = sor.u32 256, 24
    %1472 = vbcast.lane.b32.xlu0 %v956, %s1471
    %v1473 = vpop.permute.xlu0 %1472
    %s1475 = sor.u32 256, 32
    %1476 = vbcast.lane.b32.xlu0 %v956, %s1475
    %v1477 = vpop.permute.xlu0 %1476
    %s1479 = sor.u32 256, 24
    %1480 = vbcast.lane.b32.xlu0 %v968, %s1479
    %v1481 = vpop.permute.xlu0 %1480
    %s1483 = sor.u32 256, 32
    %1484 = vbcast.lane.b32.xlu0 %v968, %s1483
    %v1485 = vpop.permute.xlu0 %1484
    %v1486 = vmul.f32 %v1326, %v1361
    %v1487 = vmul.f32 %v1327, %v1365
    %v1488 = vmul.f32 %v1328, %v1369
    %v1489 = vmul.f32 %v1329, %v1373
    %v1490 = vmul.f32 %v1330, %v1377
    %v1491 = vmul.f32 %v1331, %v1381
    %v1492 = vmul.f32 %v1332, %v1385
    %v1493 = vmul.f32 %v1333, %v1389
    %v1494 = vmul.f32 %v1334, %v1393
    %v1495 = vmul.f32 %v1335, %v1397
    %v1496 = vmul.f32 %v1336, %v1401
    %v1497 = vmul.f32 %v1337, %v1405
    %v1498 = vmul.f32 %v1338, %v1409
    %v1499 = vmul.f32 %v1339, %v1413
    %v1500 = vmul.f32 %v1340, %v1417
    %v1501 = vmul.f32 %v1341, %v1421
    %v1502 = vmul.f32 %v1342, %v1425
    %v1503 = vmul.f32 %v1343, %v1429
    %v1504 = vmul.f32 %v1344, %v1433
    %v1505 = vmul.f32 %v1345, %v1437
    %v1506 = vmul.f32 %v1346, %v1441
    %v1507 = vmul.f32 %v1347, %v1445
    %v1508 = vmul.f32 %v1348, %v1449
    %v1509 = vmul.f32 %v1349, %v1453
    %v1510 = vmul.f32 %v1350, %v1457
    %v1511 = vmul.f32 %v1351, %v1461
    %v1512 = vmul.f32 %v1352, %v1465
    %v1513 = vmul.f32 %v1353, %v1469
    %v1514 = vmul.f32 %v1354, %v1473
    %v1515 = vmul.f32 %v1355, %v1477
    %v1516 = vmul.f32 %v1356, %v1481
    %v1517 = vmul.f32 %v1357, %v1485
    %v1518 = vsel %vm236, %v1486, 0.0
    %v1519 = vsel %vm236, %v1487, 0.0
    %v1520 = vadd.f32 %v1518, %v1519
    %v1521 = vrot.slane %v1520, 4
    %v1522 = vadd.f32 %v1520, %v1521
    %v1523 = vrot.slane %v1522, 2
    %v1524 = vadd.f32 %v1522, %v1523
    %v1525 = vrot.slane %v1524, 1
    %v1526 = vadd.f32 %v1524, %v1525
    %v1527 = vsel %vm236, %v1488, 0.0
    %v1528 = vsel %vm236, %v1489, 0.0
    %v1529 = vadd.f32 %v1527, %v1528
    %v1530 = vrot.slane %v1529, 4
    %v1531 = vadd.f32 %v1529, %v1530
    %v1532 = vrot.slane %v1531, 2
    %v1533 = vadd.f32 %v1531, %v1532
    %v1534 = vrot.slane %v1533, 1
    %v1535 = vadd.f32 %v1533, %v1534
    %v1536 = vsel %vm236, %v1490, 0.0
    %v1537 = vsel %vm236, %v1491, 0.0
    %v1538 = vadd.f32 %v1536, %v1537
    %v1539 = vrot.slane %v1538, 4
    %v1540 = vadd.f32 %v1538, %v1539
    %v1541 = vrot.slane %v1540, 2
    %v1542 = vadd.f32 %v1540, %v1541
    %v1543 = vrot.slane %v1542, 1
    %v1544 = vadd.f32 %v1542, %v1543
    %v1545 = vsel %vm236, %v1492, 0.0
    %v1546 = vsel %vm236, %v1493, 0.0
    %v1547 = vadd.f32 %v1545, %v1546
    %v1548 = vrot.slane %v1547, 4
    %v1549 = vadd.f32 %v1547, %v1548
    %v1550 = vrot.slane %v1549, 2
    %v1551 = vadd.f32 %v1549, %v1550
    %v1552 = vrot.slane %v1551, 1
    %v1553 = vadd.f32 %v1551, %v1552
    %v1554 = vsel %vm236, %v1494, 0.0
    %v1555 = vsel %vm236, %v1495, 0.0
    %v1556 = vadd.f32 %v1554, %v1555
    %v1557 = vrot.slane %v1556, 4
    %v1558 = vadd.f32 %v1556, %v1557
    %v1559 = vrot.slane %v1558, 2
    %v1560 = vadd.f32 %v1558, %v1559
    %v1561 = vrot.slane %v1560, 1
    %v1562 = vadd.f32 %v1560, %v1561
    %v1563 = vsel %vm236, %v1496, 0.0
    %v1564 = vsel %vm236, %v1497, 0.0
    %v1565 = vadd.f32 %v1563, %v1564
    %v1566 = vrot.slane %v1565, 4
    %v1567 = vadd.f32 %v1565, %v1566
    %v1568 = vrot.slane %v1567, 2
    %v1569 = vadd.f32 %v1567, %v1568
    %v1570 = vrot.slane %v1569, 1
    %v1571 = vadd.f32 %v1569, %v1570
    %v1572 = vsel %vm236, %v1498, 0.0
    %v1573 = vsel %vm236, %v1499, 0.0
    %v1574 = vadd.f32 %v1572, %v1573
    %v1575 = vrot.slane %v1574, 4
    %v1576 = vadd.f32 %v1574, %v1575
    %v1577 = vrot.slane %v1576, 2
    %v1578 = vadd.f32 %v1576, %v1577
    %v1579 = vrot.slane %v1578, 1
    %v1580 = vadd.f32 %v1578, %v1579
    %v1581 = vsel %vm236, %v1500, 0.0
    %v1582 = vsel %vm236, %v1501, 0.0
    %v1583 = vadd.f32 %v1581, %v1582
    %v1584 = vrot.slane %v1583, 4
    %v1585 = vadd.f32 %v1583, %v1584
    %v1586 = vrot.slane %v1585, 2
    %v1587 = vadd.f32 %v1585, %v1586
    %v1588 = vrot.slane %v1587, 1
    %v1589 = vadd.f32 %v1587, %v1588
    %v1590 = vsel %vm236, %v1502, 0.0
    %v1591 = vsel %vm236, %v1503, 0.0
    %v1592 = vadd.f32 %v1590, %v1591
    %v1593 = vrot.slane %v1592, 4
    %v1594 = vadd.f32 %v1592, %v1593
    %v1595 = vrot.slane %v1594, 2
    %v1596 = vadd.f32 %v1594, %v1595
    %v1597 = vrot.slane %v1596, 1
    %v1598 = vadd.f32 %v1596, %v1597
    %v1599 = vsel %vm236, %v1504, 0.0
    %v1600 = vsel %vm236, %v1505, 0.0
    %v1601 = vadd.f32 %v1599, %v1600
    %v1602 = vrot.slane %v1601, 4
    %v1603 = vadd.f32 %v1601, %v1602
    %v1604 = vrot.slane %v1603, 2
    %v1605 = vadd.f32 %v1603, %v1604
    %v1606 = vrot.slane %v1605, 1
    %v1607 = vadd.f32 %v1605, %v1606
    %v1608 = vsel %vm236, %v1506, 0.0
    %v1609 = vsel %vm236, %v1507, 0.0
    %v1610 = vadd.f32 %v1608, %v1609
    %v1611 = vrot.slane %v1610, 4
    %v1612 = vadd.f32 %v1610, %v1611
    %v1613 = vrot.slane %v1612, 2
    %v1614 = vadd.f32 %v1612, %v1613
    %v1615 = vrot.slane %v1614, 1
    %v1616 = vadd.f32 %v1614, %v1615
    %v1617 = vsel %vm236, %v1508, 0.0
    %v1618 = vsel %vm236, %v1509, 0.0
    %v1619 = vadd.f32 %v1617, %v1618
    %v1620 = vrot.slane %v1619, 4
    %v1621 = vadd.f32 %v1619, %v1620
    %v1622 = vrot.slane %v1621, 2
    %v1623 = vadd.f32 %v1621, %v1622
    %v1624 = vrot.slane %v1623, 1
    %v1625 = vadd.f32 %v1623, %v1624
    %v1626 = vsel %vm236, %v1510, 0.0
    %v1627 = vsel %vm236, %v1511, 0.0
    %v1628 = vadd.f32 %v1626, %v1627
    %v1629 = vrot.slane %v1628, 4
    %v1630 = vadd.f32 %v1628, %v1629
    %v1631 = vrot.slane %v1630, 2
    %v1632 = vadd.f32 %v1630, %v1631
    %v1633 = vrot.slane %v1632, 1
    %v1634 = vadd.f32 %v1632, %v1633
    %v1635 = vsel %vm236, %v1512, 0.0
    %v1636 = vsel %vm236, %v1513, 0.0
    %v1637 = vadd.f32 %v1635, %v1636
    %v1638 = vrot.slane %v1637, 4
    %v1639 = vadd.f32 %v1637, %v1638
    %v1640 = vrot.slane %v1639, 2
    %v1641 = vadd.f32 %v1639, %v1640
    %v1642 = vrot.slane %v1641, 1
    %v1643 = vadd.f32 %v1641, %v1642
    %v1644 = vsel %vm236, %v1514, 0.0
    %v1645 = vsel %vm236, %v1515, 0.0
    %v1646 = vadd.f32 %v1644, %v1645
    %v1647 = vrot.slane %v1646, 4
    %v1648 = vadd.f32 %v1646, %v1647
    %v1649 = vrot.slane %v1648, 2
    %v1650 = vadd.f32 %v1648, %v1649
    %v1651 = vrot.slane %v1650, 1
    %v1652 = vadd.f32 %v1650, %v1651
    %v1653 = vsel %vm236, %v1516, 0.0
    %v1654 = vsel %vm236, %v1517, 0.0
    %v1655 = vadd.f32 %v1653, %v1654
    %v1656 = vrot.slane %v1655, 4
    %v1657 = vadd.f32 %v1655, %v1656
    %v1658 = vrot.slane %v1657, 2
    %v1659 = vadd.f32 %v1657, %v1658
    %v1660 = vrot.slane %v1659, 1
    %v1661 = vadd.f32 %v1659, %v1660
    %v1662 = vsub.f32 0.0, %v134
    %v1663 = vsub.f32 0.0, %v137
    %v1664 = vmul.f32 %v1662, 1.442695
    %v1665 = vpow.pop %v1664
    %v1666 = vmul.f32 %v1663, 1.442695
    %v1667 = vpow.pop %v1666
    %v1668 = vadd.f32 %v1665, 1.0
    %v1669 = vadd.f32 %v1667, 1.0
    %v1670 = vrcp.pop %v1668
    %v1671 = vmul.f32 1.0, %v1670
    %v1672 = vrcp.pop %v1669
    %v1673 = vmul.f32 1.0, %v1672
    %v1674 = vmul.f32 %v134, %v1671
    %v1675 = vmul.f32 %v137, %v1673
    %v1678 = vrot.slane %v1674, 1
    %v1679 = vrot.slane %v1674, 2
    %v1680 = vrot.slane %v1674, 3
    %v1681 = vrot.slane %v1674, 4
    %v1682 = vrot.slane %v1674, 5
    %v1683 = vrot.slane %v1674, 6
    %v1684 = vrot.slane %v1674, 7
    %v1685 = vrot.slane %v1675, 1
    %v1686 = vrot.slane %v1675, 2
    %v1687 = vrot.slane %v1675, 3
    %v1688 = vrot.slane %v1675, 4
    %v1689 = vrot.slane %v1675, 5
    %v1690 = vrot.slane %v1675, 6
    %v1691 = vrot.slane %v1675, 7
    %1692 = vrot.lane.b32.xlu0 %v1674, 64
    %v1693 = vpop.permute.xlu0 %1692
    %1694 = vrot.lane.b32.xlu0 %v1678, 64
    %v1695 = vpop.permute.xlu0 %1694
    %1696 = vrot.lane.b32.xlu0 %v1679, 64
    %v1697 = vpop.permute.xlu0 %1696
    %1698 = vrot.lane.b32.xlu0 %v1680, 64
    %v1699 = vpop.permute.xlu0 %1698
    %1700 = vrot.lane.b32.xlu0 %v1681, 64
    %v1701 = vpop.permute.xlu0 %1700
    %1702 = vrot.lane.b32.xlu0 %v1682, 64
    %v1703 = vpop.permute.xlu0 %1702
    %1704 = vrot.lane.b32.xlu0 %v1683, 64
    %v1705 = vpop.permute.xlu0 %1704
    %1706 = vrot.lane.b32.xlu0 %v1684, 64
    %v1707 = vpop.permute.xlu0 %1706
    %1708 = vrot.lane.b32.xlu0 %v1675, 64
    %v1709 = vpop.permute.xlu0 %1708
    %1710 = vrot.lane.b32.xlu0 %v1685, 64
    %v1711 = vpop.permute.xlu0 %1710
    %1712 = vrot.lane.b32.xlu0 %v1686, 64
    %v1713 = vpop.permute.xlu0 %1712
    %1714 = vrot.lane.b32.xlu0 %v1687, 64
    %v1715 = vpop.permute.xlu0 %1714
    %1716 = vrot.lane.b32.xlu0 %v1688, 64
    %v1717 = vpop.permute.xlu0 %1716
    %1718 = vrot.lane.b32.xlu0 %v1689, 64
    %v1719 = vpop.permute.xlu0 %1718
    %1720 = vrot.lane.b32.xlu0 %v1690, 64
    %v1721 = vpop.permute.xlu0 %1720
    %1722 = vrot.lane.b32.xlu0 %v1691, 64
    %v1723 = vpop.permute.xlu0 %1722
    %v1740 = vmul.f32 %v1526, %v1693
    %v1741 = vmul.f32 %v1535, %v1695
    %v1742 = vmul.f32 %v1544, %v1697
    %v1743 = vmul.f32 %v1553, %v1699
    %v1744 = vmul.f32 %v1562, %v1701
    %v1745 = vmul.f32 %v1571, %v1703
    %v1746 = vmul.f32 %v1580, %v1705
    %v1747 = vmul.f32 %v1589, %v1707
    %v1748 = vmul.f32 %v1598, %v1709
    %v1749 = vmul.f32 %v1607, %v1711
    %v1750 = vmul.f32 %v1616, %v1713
    %v1751 = vmul.f32 %v1625, %v1715
    %v1752 = vmul.f32 %v1634, %v1717
    %v1753 = vmul.f32 %v1643, %v1719
    %v1754 = vmul.f32 %v1652, %v1721
    %v1755 = vmul.f32 %v1661, %v1723
    %v1756 = vpack.c.bf16 %v1740, %v1740
    %v1757 = vpack.c.bf16 %v1741, %v1741
    %v1758 = vpack.c.bf16 %v1742, %v1742
    %v1759 = vpack.c.bf16 %v1743, %v1743
    %v1760 = vpack.c.bf16 %v1744, %v1744
    %v1761 = vpack.c.bf16 %v1745, %v1745
    %v1762 = vpack.c.bf16 %v1746, %v1746
    %v1763 = vpack.c.bf16 %v1747, %v1747
    %v1764 = vpack.c.bf16 %v1748, %v1748
    %v1765 = vpack.c.bf16 %v1749, %v1749
    %v1766 = vpack.c.bf16 %v1750, %v1750
    %v1767 = vpack.c.bf16 %v1751, %v1751
    %v1768 = vpack.c.bf16 %v1752, %v1752
    %v1769 = vpack.c.bf16 %v1753, %v1753
    %v1770 = vpack.c.bf16 %v1754, %v1754
    %v1771 = vpack.c.bf16 %v1755, %v1755
    %v1772 = vld [vmem:[%s10] sm:$0xf]
    %v1773 = vld [vmem:[%s10 + $0x4] sm:$0xf]
    %v1774 = vld [vmem:[%s10 + $0x8] sm:$0xf]
    %v1775 = vld [vmem:[%s10 + $0xc] sm:$0xf]
    %v1776 = vld [vmem:[%s10 + $0x10] sm:$0xf]
    %v1777 = vld [vmem:[%s10 + $0x14] sm:$0xf]
    %v1778 = vld [vmem:[%s10 + $0x18] sm:$0xf]
    %v1779 = vld [vmem:[%s10 + $0x1c] sm:$0xf]
    %v1780 = vld [vmem:[%s11] sm:$0x1]
    %v1782 = vlaneseq
    %v1783 = vshrl.u32 %v1782, 7
    %v1784 = vsub.s32 0, %v1783
    %v1785 = vrot.slane %v1780, %v1784
    %v1803 = vunpack.c.l.b16 %v1756
    %v1804 = vunpack.c.l.b16 %v1757
    %v1805 = vunpack.c.l.b16 %v1758
    %v1806 = vunpack.c.l.b16 %v1759
    %v1807 = vunpack.c.l.b16 %v1760
    %v1808 = vunpack.c.l.b16 %v1761
    %v1809 = vunpack.c.l.b16 %v1762
    %v1810 = vunpack.c.l.b16 %v1763
    %v1811 = vunpack.c.l.b16 %v1764
    %v1812 = vunpack.c.l.b16 %v1765
    %v1813 = vunpack.c.l.b16 %v1766
    %v1814 = vunpack.c.l.b16 %v1767
    %v1815 = vunpack.c.l.b16 %v1768
    %v1816 = vunpack.c.l.b16 %v1769
    %v1817 = vunpack.c.l.b16 %v1770
    %v1818 = vunpack.c.l.b16 %v1771
    %v1819 = vrot.slane %v1804, 7
    %vm1820 = vcmask 1041409
    %v1821 = vsel %vm1820, %v1819, %v1803
    %v1822 = vrot.slane %v1805, 6
    %vm1823 = vcmask 1042434
    %v1824 = vsel %vm1823, %v1822, %v1821
    %v1825 = vrot.slane %v1806, 5
    %vm1826 = vcmask 1043459
    %v1827 = vsel %vm1826, %v1825, %v1824
    %v1828 = vrot.slane %v1807, 4
    %vm1829 = vcmask 1044484
    %v1830 = vsel %vm1829, %v1828, %v1827
    %v1831 = vrot.slane %v1808, 3
    %vm1832 = vcmask 1045509
    %v1833 = vsel %vm1832, %v1831, %v1830
    %v1834 = vrot.slane %v1809, 2
    %vm1835 = vcmask 1046534
    %v1836 = vsel %vm1835, %v1834, %v1833
    %v1837 = vrot.slane %v1810, 1
    %vm1838 = vcmask 1047559
    %v1839 = vsel %vm1838, %v1837, %v1836
    %v1840 = vrot.slane %v1812, 7
    %v1841 = vsel %vm1820, %v1840, %v1811
    %v1842 = vrot.slane %v1813, 6
    %v1843 = vsel %vm1823, %v1842, %v1841
    %v1844 = vrot.slane %v1814, 5
    %v1845 = vsel %vm1826, %v1844, %v1843
    %v1846 = vrot.slane %v1815, 4
    %v1847 = vsel %vm1829, %v1846, %v1845
    %v1848 = vrot.slane %v1816, 3
    %v1849 = vsel %vm1832, %v1848, %v1847
    %v1850 = vrot.slane %v1817, 2
    %v1851 = vsel %vm1835, %v1850, %v1849
    %v1852 = vrot.slane %v1818, 1
    %v1853 = vsel %vm1838, %v1852, %v1851
    %v1854 = vpack.c.b16 %v1853, %v1839
    %v1863 = vunpack.c.l.b16 %v1772
    %v1864 = vunpack.c.l.b16 %v1773
    %v1865 = vunpack.c.l.b16 %v1774
    %v1866 = vunpack.c.l.b16 %v1775
    %v1867 = vunpack.c.l.b16 %v1776
    %v1868 = vunpack.c.l.b16 %v1777
    %v1869 = vunpack.c.l.b16 %v1778
    %v1870 = vunpack.c.l.b16 %v1779
    %v1871 = vpack.c.b16 %v1864, %v1863
    %v1872 = vpack.c.b16 %v1866, %v1865
    %v1873 = vpack.c.b16 %v1868, %v1867
    %v1874 = vpack.c.b16 %v1870, %v1869
    %v1880 = vsel %vm236, %v1854, 0
    %1882 = vmatprep.subr.bf16.mxu0 0
    %1883 = vmatpush1.bf16.msra.mxu0 0
    %1884 = vmatprep.subr.bf16.mxu0 0
    %1885 = vmatpush1.bf16.msra.mxu0 0
    %1886 = vmatprep.subr.bf16.mxu0 0
    %1887 = vmatpush1.bf16.msra.mxu0 0
    %1888 = vmatprep.subr.bf16.mxu0 0
    %1889 = vmatpush1.bf16.msra.mxu0 0
    %1890 = vmatprep.subr.bf16.mxu0 0
    %1891 = vmatpush1.bf16.msra.mxu0 %v1874
    %1892 = vmatprep.subr.bf16.mxu0 0
    %1893 = vmatpush1.bf16.msra.mxu0 %v1873
    %1894 = vmatprep.subr.bf16.mxu0 0
    %1895 = vmatpush1.bf16.msra.mxu0 %v1872
    %1896 = vmatprep.subr.bf16.mxu0 0
    %1897 = vmatpush1.bf16.msra.mxu0 %v1871
    %1898 = vmatprep.subr.bf16.mxu0 0
    %1899 = vmatpush2.bf16.msra.mxu0 0
    %1900 = vmatprep.subr.bf16.mxu0 0
    %1901 = vmatpush2.bf16.msra.mxu0 0
    %1902 = vmatprep.subr.bf16.mxu0 0
    %1903 = vmatpush2.bf16.msra.mxu0 0
    %1904 = vmatprep.subr.bf16.mxu0 0
    %1905 = vmatpush2.bf16.msra.mxu0 0
    %1906 = vmatprep.subr.bf16.mxu0 0
    %1907 = vmatpush2.bf16.msra.mxu0 0
    %1908 = vmatprep.subr.bf16.mxu0 0
    %1909 = vmatpush2.bf16.msra.mxu0 0
    %1910 = vmatprep.subr.bf16.mxu0 0
    %1911 = vmatpush2.bf16.msra.mxu0 0
    %1912 = vmatprep.subr.bf16.mxu0 0
    %1913 = vmatpush2.bf16.msra.mxu0 0
    %1914 = vmatprep.mubr.bf16.mxu0 0
    %1915 = vmatmul.mubr.bf16.gmra.mxu0 %v1880
    %v1916 = vpop.f32.mrf.mxu0
    %v1917 = vadd.f32 %v1785, %v1916
    %v1918 = vpop.f32.mrf.mxu0
    %v1919 = vpop.f32.mrf.mxu0
    %v1920 = vadd.f32 %v1785, %v1919
    %v1921 = vpop.f32.mrf.mxu0
    %1922 = vdwg.mxu0
    %v1923 = vadd.f32 %v1917, %v43
    %v1924 = vadd.f32 %v1920, %v44
    %1925 = vst.msk [vmem:[#allocation5] sm:$0xff] %vm47, %v1923
    %1926 = vst.msk [vmem:[#allocation5 + $0x8] sm:$0xff] %vm47, %v1924
    // Predicated region
    $region50: #{tpu_custom_call.1} parent=1 // pred_check
      _
    $region51: #{tpu_custom_call.1} parent=1 // pred_check_branch
      %1928 = sbr.rel (0) target = $region53
    $region52: #{tpu_custom_call.1} parent=1 // pred_region
      %s1930 = ssub.s32 256, 256
      %1931 = vsyncadd [#allocation6], %s1930
      %s1932 = sshll.u32 [#allocation5], 4
      %s1933 = int_to_ptr.vmem [resolvable:$true] %s1932
      %1938 = dma.vmem_to_hbm [thread:$0]  %s1933, 256, %s12, [#allocation6], 128, 128, 8
    $region53: #{tpu_custom_call.1} parent=1 // pred_fallthru
      _
    // Predicated region
    $region54: #{tpu_custom_call.1} parent=1 // pred_check
      _
    $region55: #{tpu_custom_call.1} parent=1 // pred_check_branch
      %1940 = sbr.rel (0) target = $region57
    $region56: #{tpu_custom_call.1} parent=1 // pred_region
      %1941 = dma.done [#allocation6], 256
    $region57: #{tpu_custom_call.1} parent=1 // pred_fallthru
      _
    %1942 = vsyncpa [#allocation6], 1

</llo_original>
